<compile_context>
chip_gen: v7x
topology: tpu7x:2x2x1
jax: 0.10.0
libtpu: 0.0.40
codegen_flags: <defaults>
</compile_context>

<pallas_src>
import functools

import jax
import jax.numpy as jnp
from jax import lax
from jax.experimental import pallas as pl
from jax.experimental.pallas import tpu as pltpu


def _round_up(n, m):
    return (n + m - 1) // m * m


def make_lstm_kernel(T, Bp, Hp, bf16_projection=False):
    """Whole-sequence LSTM kernel for static T, padded batch/hidden."""

    def lstm_kernel(x_ref, wih_ref, whh_ref, b_ref, wfc_ref, bfc_ref,
                    out_ref, xproj_ref):
        # ---- Hoisted input projection (independent of h): one MXU matmul,
        # written straight to VMEM scratch so it never lives in vregs.
        if bf16_projection:
            # Off-recurrence GEMM: bf16 operands are safe (error does not
            # compound over T); accumulation stays f32.
            x_op = x_ref[...].astype(jnp.bfloat16)
            w_op = wih_ref[...].astype(jnp.bfloat16)
        else:
            x_op = x_ref[...]
            w_op = wih_ref[...]
        xproj_ref[...] = (
            jnp.dot(x_op, w_op, preferred_element_type=jnp.float32)
            + b_ref[...]
        )  # (T*Bp, 4*Hp)

        # ---- Serial recurrence. h/c are single-vreg carries; whh streams
        # from VMEM inside the loop body (never pinned in registers).
        def step(t, carry):
            h, c = carry
            xp = xproj_ref[pl.ds(pl.multiple_of(t * Bp, Bp), Bp), :]
            gates = xp + jnp.dot(
                h, whh_ref[...], preferred_element_type=jnp.float32
            )  # (Bp, 4*Hp), f32 on the recurrent path
            # Packed gate order (i, f, o, g): one sigmoid over 3*Hp lanes,
            # one tanh over the last Hp lanes.  Static 128-aligned slices.
            sig = jax.nn.sigmoid(gates[:, : 3 * Hp])
            i_g = sig[:, 0 * Hp:1 * Hp]
            f_g = sig[:, 1 * Hp:2 * Hp]
            o_g = sig[:, 2 * Hp:3 * Hp]
            g_g = jnp.tanh(gates[:, 3 * Hp:4 * Hp])
            c = f_g * c + i_g * g_g
            h = o_g * jnp.tanh(c)
            return (h, c)

        h0 = jnp.zeros((Bp, Hp), jnp.float32)
        c0 = jnp.zeros((Bp, Hp), jnp.float32)
        h, _ = lax.fori_loop(0, T, step, (h0, c0), unroll=min(T, 8))

        # ---- Final Linear on the last hidden state (lane-dense padded out).
        out_ref[...] = (
            jnp.dot(h, wfc_ref[...], preferred_element_type=jnp.float32)
            + bfc_ref[...]
        ).astype(out_ref.dtype)

    return lstm_kernel


def _vmem_limit_bytes(T, Bp, Dp, Hp, Op):
    """Explicit VMEM budget: resident buffers + scratch + generous margin."""
    elems = (
        T * Bp * Dp          # x_flat
        + Dp * 4 * Hp        # wih (fused gates)
        + Hp * 4 * Hp        # whh (fused gates)
        + 8 * 4 * Hp         # bias (sublane-padded)
        + Hp * Op            # wfc
        + 8 * Op             # bfc (sublane-padded)
        + Bp * Op            # output
        + T * Bp * 4 * Hp    # x_proj scratch
    )
    return max(8 << 20, 2 * elems * 4 + (1 << 20))


def lstm_model_forward(x_btd, params, output_dim, bf16_projection=False):
    """x_btd: (B, T, D) float32 (PyTorch batch_first). Returns (B, output_dim)."""
    wih, whh, b, wfc, bfc = params
    B, T, D = x_btd.shape
    Dp = wih.shape[0]
    Hp = whh.shape[0]
    Op = wfc.shape[1]
    Bp = _round_up(B, 8)

    # Time-major, zero-padded to hardware tiles, flattened to (T*Bp, Dp).
    x_tbd = jnp.transpose(x_btd, (1, 0, 2))                      # (T, B, D)
    x_pad = jnp.zeros((T, Bp, Dp), jnp.float32).at[:, :B, :D].set(x_tbd)
    x_flat = x_pad.reshape(T * Bp, Dp)

    kernel = make_lstm_kernel(T, Bp, Hp, bf16_projection=bf16_projection)
    vmem_spec = pl.BlockSpec(memory_space=pltpu.MemorySpace.VMEM)

    out_padded = pl.pallas_call(
        kernel,
        out_shape=jax.ShapeDtypeStruct((Bp, Op), jnp.float32),
        in_specs=[vmem_spec] * 6,
        out_specs=vmem_spec,
        scratch_shapes=[pltpu.VMEM((T * Bp, 4 * Hp), jnp.float32)],
        compiler_params=pltpu.CompilerParams(
            vmem_limit_bytes=_vmem_limit_bytes(T, Bp, Dp, Hp, Op)),
    )(x_flat, wih, whh, b, wfc, bfc)

    return out_padded[:B, :output_dim]


def init_params(key, input_dim, hidden_dim, output_dim):
    """Deterministic init mimicking PyTorch's U(-1/sqrt(H), 1/sqrt(H)).

    Returns (kernel_params, raw_params):
      kernel_params: padded, fused, MXU-friendly layouts with packed gate
                     order (i, f, o, g) so sigmoid covers one contiguous slab.
      raw_params:    PyTorch-style tensors for the pure-JAX reference.
    """
    k = 1.0 / jnp.sqrt(hidden_dim)
    ks = jax.random.split(key, 6)
    w_ih = jax.random.uniform(ks[0], (4 * hidden_dim, input_dim), jnp.float32, -k, k)
    w_hh = jax.random.uniform(ks[1], (4 * hidden_dim, hidden_dim), jnp.float32, -k, k)
    b_ih = jax.random.uniform(ks[2], (4 * hidden_dim,), jnp.float32, -k, k)
    b_hh = jax.random.uniform(ks[3], (4 * hidden_dim,), jnp.float32, -k, k)
    w_fc = jax.random.uniform(ks[4], (output_dim, hidden_dim), jnp.float32, -k, k)
    b_fc = jax.random.uniform(ks[5], (output_dim,), jnp.float32, -k, k)

    H, D, O = hidden_dim, input_dim, output_dim
    Hp = _round_up(H, 128)
    Dp = _round_up(D, 128)
    Op = _round_up(O, 128)

    # Fused + padded gate weights.  PyTorch row order is (i, f, g, o); we pack
    # lane slots as (i, f, o, g) so slots 0..2 take sigmoid and slot 3 tanh.
    # All padded rows/columns are exactly zero (see invariant note at top).
    wih_cat = jnp.zeros((Dp, 4 * Hp), jnp.float32)
    whh_cat = jnp.zeros((Hp, 4 * Hp), jnp.float32)
    b_cat = jnp.zeros((1, 4 * Hp), jnp.float32)
    w_ih_g = w_ih.reshape(4, H, D)      # (4, H, D) in PyTorch order i,f,g,o
    w_hh_g = w_hh.reshape(4, H, H)
    b_g = (b_ih + b_hh).reshape(4, H)   # PyTorch adds both biases
    packed_order = (0, 1, 3, 2)         # packed slot s <- PyTorch gate index
    for s, g in enumerate(packed_order):
        wih_cat = wih_cat.at[:D, s * Hp:s * Hp + H].set(w_ih_g[g].T)
        whh_cat = whh_cat.at[:H, s * Hp:s * Hp + H].set(w_hh_g[g].T)
        b_cat = b_cat.at[0, s * Hp:s * Hp + H].set(b_g[g])

    wfc = jnp.zeros((Hp, Op), jnp.float32).at[:H, :O].set(w_fc.T)
    bfc = jnp.zeros((1, Op), jnp.float32).at[0, :O].set(b_fc)

    kernel_params = (wih_cat, whh_cat, b_cat, wfc, bfc)
    raw_params = (w_ih, w_hh, b_ih, b_hh, w_fc, b_fc)
    return kernel_params, raw_params


def lstm_model_ref(x_btd, raw_params):
    """Pure-JAX reference matching nn.LSTM (batch_first) + nn.Linear."""
    w_ih, w_hh, b_ih, b_hh, w_fc, b_fc = raw_params
    B, T, D = x_btd.shape
    H = w_hh.shape[1]
    h = jnp.zeros((B, H), jnp.float32)
    c = jnp.zeros((B, H), jnp.float32)

    def step(carry, x_t):
        h, c = carry
        gates = x_t @ w_ih.T + b_ih + h @ w_hh.T + b_hh
        i, f, g, o = jnp.split(gates, 4, axis=-1)
        i, f, o = jax.nn.sigmoid(i), jax.nn.sigmoid(f), jax.nn.sigmoid(o)
        g = jnp.tanh(g)
        c = f * c + i * g
        h = o * jnp.tanh(c)
        return (h, c), None

    (h, c), _ = jax.lax.scan(step, (h, c), jnp.transpose(x_btd, (1, 0, 2)))
    return h @ w_fc.T + b_fc


if __name__ == "__main__":
    input_dim, hidden_dim, output_dim = 28, 100, 10
    B, T = 2, 8

    key = jax.random.PRNGKey(0)
    kx, kp = jax.random.split(key)
    x = jax.random.normal(kx, (B, T, input_dim), jnp.float32)

    params, raw_params = init_params(kp, input_dim, hidden_dim, output_dim)
    ref = lstm_model_ref(x, raw_params)

    # Exact-semantics path (all f32): tight tolerance.
    fwd = jax.jit(functools.partial(
        lstm_model_forward, output_dim=output_dim, bf16_projection=False))
    out = jax.block_until_ready(fwd(x, params))
    assert out.shape == (B, output_dim)
    assert jnp.allclose(out, ref, atol=1e-4, rtol=1e-4), (
        f"f32 path max abs err = {jnp.max(jnp.abs(out - ref))}")

    # Throughput path: bf16 operands on the non-recurrent input projection
    # only (recurrence and elementwise stay f32) -> looser, explicit tolerance.
    fwd_bf16 = jax.jit(functools.partial(
        lstm_model_forward, output_dim=output_dim, bf16_projection=True))
    out_bf16 = jax.block_until_ready(fwd_bf16(x, params))
    assert jnp.allclose(out_bf16, ref, atol=5e-3, rtol=5e-3), (
        f"bf16-projection path max abs err = {jnp.max(jnp.abs(out_bf16 - ref))}")

    print("KERNEL_OK")
</pallas_src>

<mosaic_0001>
module attributes {stable_mosaic.version = 11 : i64} {
  func.func @lstm_kernel(%arg0: memref<64x128xf32, #tpu.memory_space<vmem>>, %arg1: memref<128x512xf32, #tpu.memory_space<vmem>>, %arg2: memref<128x512xf32, #tpu.memory_space<vmem>>, %arg3: memref<1x512xf32, #tpu.memory_space<vmem>>, %arg4: memref<128x128xf32, #tpu.memory_space<vmem>>, %arg5: memref<1x128xf32, #tpu.memory_space<vmem>>, %arg6: memref<8x128xf32, #tpu.memory_space<vmem>>, %arg7: memref<64x512xf32, #tpu.memory_space<vmem>>) attributes {dimension_semantics = [], scalar_prefetch = 0 : i64, scratch_operands = 1 : i64, tpu.core_type = #tpu.core_type<tc>} {
    %c0 = arith.constant 0 : index
    %c0_0 = arith.constant 0 : index
    %0 = vector.load %arg0[%c0, %c0_0] : memref<64x128xf32, #tpu.memory_space<vmem>>, vector<64x128xf32>
    %c0_1 = arith.constant 0 : index
    %c0_2 = arith.constant 0 : index
    %1 = vector.load %arg1[%c0_1, %c0_2] : memref<128x512xf32, #tpu.memory_space<vmem>>, vector<128x512xf32>
    %cst = arith.constant dense<0.000000e+00> : vector<64x512xf32>
    %2 = tpu.matmul %0, %1, %cst {dimension_numbers = #tpu.dot_dimension_numbers<[1], [0], [0], [1], [0, 0, 1, 1], [], []>} : vector<64x128xf32>, vector<128x512xf32>, vector<64x512xf32> -> vector<64x512xf32>
    %c0_3 = arith.constant 0 : index
    %c0_4 = arith.constant 0 : index
    %3 = vector.load %arg3[%c0_3, %c0_4] : memref<1x512xf32, #tpu.memory_space<vmem>>, vector<1x512xf32>
    %4 = vector.broadcast %3 : vector<1x512xf32> to vector<64x512xf32>
    %5 = arith.addf %2, %4 : vector<64x512xf32>
    %c0_5 = arith.constant 0 : index
    %c0_6 = arith.constant 0 : index
    %6 = vector.load %arg7[%c0_5, %c0_6] : memref<64x512xf32, #tpu.memory_space<vmem>>, vector<64x512xf32>
    tpu.vector_store %arg7[%c0_5, %c0_6], %5 {strides = array<i32>} : memref<64x512xf32, #tpu.memory_space<vmem>>, vector<64x512xf32>,
    %cst_7 = arith.constant 0.000000e+00 : f32
    %7 = vector.broadcast %cst_7 : f32 to vector<8x128xf32>
    %cst_8 = arith.constant 0.000000e+00 : f32
    %8 = vector.broadcast %cst_8 : f32 to vector<8x128xf32>
    %c0_i32 = arith.constant 0 : i32
    %c8_i32 = arith.constant 8 : i32
    %9 = arith.muli %c0_i32, %c8_i32 : i32
    %10 = tpu.assume_multiple %9, 8 : i32
    %11 = arith.index_cast %10 : i32 to index
    %c0_9 = arith.constant 0 : index
    %12 = vector.load %arg7[%11, %c0_9] : memref<64x512xf32, #tpu.memory_space<vmem>>, vector<8x512xf32>
    %c0_10 = arith.constant 0 : index
    %c0_11 = arith.constant 0 : index
    %13 = vector.load %arg2[%c0_10, %c0_11] : memref<128x512xf32, #tpu.memory_space<vmem>>, vector<128x512xf32>
    %cst_12 = arith.constant dense<0.000000e+00> : vector<8x512xf32>
    %14 = tpu.matmul %7, %13, %cst_12 {dimension_numbers = #tpu.dot_dimension_numbers<[1], [0], [0], [1], [0, 0, 1, 1], [], []>} : vector<8x128xf32>, vector<128x512xf32>, vector<8x512xf32> -> vector<8x512xf32>
    %15 = arith.addf %12, %14 : vector<8x512xf32>
    %16 = vector.extract_strided_slice %15 {offsets = [0, 0], sizes = [8, 384], strides = [1, 1]} : vector<8x512xf32> to vector<8x384xf32>
    %17 = arith.negf %16 : vector<8x384xf32>
    %18 = math.exp %17 : vector<8x384xf32>
    %cst_13 = arith.constant 1.000000e+00 : f32
    %19 = vector.broadcast %cst_13 : f32 to vector<8x384xf32>
    %20 = arith.addf %19, %18 : vector<8x384xf32>
    %21 = arith.divf %19, %20 : vector<8x384xf32>
    %22 = vector.extract_strided_slice %21 {offsets = [0, 0], sizes = [8, 128], strides = [1, 1]} : vector<8x384xf32> to vector<8x128xf32>
    %23 = vector.extract_strided_slice %21 {offsets = [0, 128], sizes = [8, 128], strides = [1, 1]} : vector<8x384xf32> to vector<8x128xf32>
    %24 = vector.extract_strided_slice %21 {offsets = [0, 256], sizes = [8, 128], strides = [1, 1]} : vector<8x384xf32> to vector<8x128xf32>
    %25 = vector.extract_strided_slice %15 {offsets = [0, 384], sizes = [8, 128], strides = [1, 1]} : vector<8x512xf32> to vector<8x128xf32>
    %26 = math.tanh %25 : vector<8x128xf32>
    %27 = arith.mulf %23, %8 : vector<8x128xf32>
    %28 = arith.mulf %22, %26 : vector<8x128xf32>
    %29 = arith.addf %27, %28 : vector<8x128xf32>
    %30 = math.tanh %29 : vector<8x128xf32>
    %31 = arith.mulf %24, %30 : vector<8x128xf32>
    %c1_i32 = arith.constant 1 : i32
    %c8_i32_14 = arith.constant 8 : i32
    %32 = arith.muli %c1_i32, %c8_i32_14 : i32
    %33 = tpu.assume_multiple %32, 8 : i32
    %34 = arith.index_cast %33 : i32 to index
    %c0_15 = arith.constant 0 : index
    %35 = vector.load %arg7[%34, %c0_15] : memref<64x512xf32, #tpu.memory_space<vmem>>, vector<8x512xf32>
    %c0_16 = arith.constant 0 : index
    %c0_17 = arith.constant 0 : index
    %36 = vector.load %arg2[%c0_16, %c0_17] : memref<128x512xf32, #tpu.memory_space<vmem>>, vector<128x512xf32>
    %cst_18 = arith.constant dense<0.000000e+00> : vector<8x512xf32>
    %37 = tpu.matmul %31, %36, %cst_18 {dimension_numbers = #tpu.dot_dimension_numbers<[1], [0], [0], [1], [0, 0, 1, 1], [], []>} : vector<8x128xf32>, vector<128x512xf32>, vector<8x512xf32> -> vector<8x512xf32>
    %38 = arith.addf %35, %37 : vector<8x512xf32>
    %39 = vector.extract_strided_slice %38 {offsets = [0, 0], sizes = [8, 384], strides = [1, 1]} : vector<8x512xf32> to vector<8x384xf32>
    %40 = arith.negf %39 : vector<8x384xf32>
    %41 = math.exp %40 : vector<8x384xf32>
    %cst_19 = arith.constant 1.000000e+00 : f32
    %42 = vector.broadcast %cst_19 : f32 to vector<8x384xf32>
    %43 = arith.addf %42, %41 : vector<8x384xf32>
    %44 = arith.divf %42, %43 : vector<8x384xf32>
    %45 = vector.extract_strided_slice %44 {offsets = [0, 0], sizes = [8, 128], strides = [1, 1]} : vector<8x384xf32> to vector<8x128xf32>
    %46 = vector.extract_strided_slice %44 {offsets = [0, 128], sizes = [8, 128], strides = [1, 1]} : vector<8x384xf32> to vector<8x128xf32>
    %47 = vector.extract_strided_slice %44 {offsets = [0, 256], sizes = [8, 128], strides = [1, 1]} : vector<8x384xf32> to vector<8x128xf32>
    %48 = vector.extract_strided_slice %38 {offsets = [0, 384], sizes = [8, 128], strides = [1, 1]} : vector<8x512xf32> to vector<8x128xf32>
    %49 = math.tanh %48 : vector<8x128xf32>
    %50 = arith.mulf %46, %29 : vector<8x128xf32>
    %51 = arith.mulf %45, %49 : vector<8x128xf32>
    %52 = arith.addf %50, %51 : vector<8x128xf32>
    %53 = math.tanh %52 : vector<8x128xf32>
    %54 = arith.mulf %47, %53 : vector<8x128xf32>
    %c2_i32 = arith.constant 2 : i32
    %c8_i32_20 = arith.constant 8 : i32
    %55 = arith.muli %c2_i32, %c8_i32_20 : i32
    %56 = tpu.assume_multiple %55, 8 : i32
    %57 = arith.index_cast %56 : i32 to index
    %c0_21 = arith.constant 0 : index
    %58 = vector.load %arg7[%57, %c0_21] : memref<64x512xf32, #tpu.memory_space<vmem>>, vector<8x512xf32>
    %c0_22 = arith.constant 0 : index
    %c0_23 = arith.constant 0 : index
    %59 = vector.load %arg2[%c0_22, %c0_23] : memref<128x512xf32, #tpu.memory_space<vmem>>, vector<128x512xf32>
    %cst_24 = arith.constant dense<0.000000e+00> : vector<8x512xf32>
    %60 = tpu.matmul %54, %59, %cst_24 {dimension_numbers = #tpu.dot_dimension_numbers<[1], [0], [0], [1], [0, 0, 1, 1], [], []>} : vector<8x128xf32>, vector<128x512xf32>, vector<8x512xf32> -> vector<8x512xf32>
    %61 = arith.addf %58, %60 : vector<8x512xf32>
    %62 = vector.extract_strided_slice %61 {offsets = [0, 0], sizes = [8, 384], strides = [1, 1]} : vector<8x512xf32> to vector<8x384xf32>
    %63 = arith.negf %62 : vector<8x384xf32>
    %64 = math.exp %63 : vector<8x384xf32>
    %cst_25 = arith.constant 1.000000e+00 : f32
    %65 = vector.broadcast %cst_25 : f32 to vector<8x384xf32>
    %66 = arith.addf %65, %64 : vector<8x384xf32>
    %67 = arith.divf %65, %66 : vector<8x384xf32>
    %68 = vector.extract_strided_slice %67 {offsets = [0, 0], sizes = [8, 128], strides = [1, 1]} : vector<8x384xf32> to vector<8x128xf32>
    %69 = vector.extract_strided_slice %67 {offsets = [0, 128], sizes = [8, 128], strides = [1, 1]} : vector<8x384xf32> to vector<8x128xf32>
    %70 = vector.extract_strided_slice %67 {offsets = [0, 256], sizes = [8, 128], strides = [1, 1]} : vector<8x384xf32> to vector<8x128xf32>
    %71 = vector.extract_strided_slice %61 {offsets = [0, 384], sizes = [8, 128], strides = [1, 1]} : vector<8x512xf32> to vector<8x128xf32>
    %72 = math.tanh %71 : vector<8x128xf32>
    %73 = arith.mulf %69, %52 : vector<8x128xf32>
    %74 = arith.mulf %68, %72 : vector<8x128xf32>
    %75 = arith.addf %73, %74 : vector<8x128xf32>
    %76 = math.tanh %75 : vector<8x128xf32>
    %77 = arith.mulf %70, %76 : vector<8x128xf32>
    %c3_i32 = arith.constant 3 : i32
    %c8_i32_26 = arith.constant 8 : i32
    %78 = arith.muli %c3_i32, %c8_i32_26 : i32
    %79 = tpu.assume_multiple %78, 8 : i32
    %80 = arith.index_cast %79 : i32 to index
    %c0_27 = arith.constant 0 : index
    %81 = vector.load %arg7[%80, %c0_27] : memref<64x512xf32, #tpu.memory_space<vmem>>, vector<8x512xf32>
    %c0_28 = arith.constant 0 : index
    %c0_29 = arith.constant 0 : index
    %82 = vector.load %arg2[%c0_28, %c0_29] : memref<128x512xf32, #tpu.memory_space<vmem>>, vector<128x512xf32>
    %cst_30 = arith.constant dense<0.000000e+00> : vector<8x512xf32>
    %83 = tpu.matmul %77, %82, %cst_30 {dimension_numbers = #tpu.dot_dimension_numbers<[1], [0], [0], [1], [0, 0, 1, 1], [], []>} : vector<8x128xf32>, vector<128x512xf32>, vector<8x512xf32> -> vector<8x512xf32>
    %84 = arith.addf %81, %83 : vector<8x512xf32>
    %85 = vector.extract_strided_slice %84 {offsets = [0, 0], sizes = [8, 384], strides = [1, 1]} : vector<8x512xf32> to vector<8x384xf32>
    %86 = arith.negf %85 : vector<8x384xf32>
    %87 = math.exp %86 : vector<8x384xf32>
    %cst_31 = arith.constant 1.000000e+00 : f32
    %88 = vector.broadcast %cst_31 : f32 to vector<8x384xf32>
    %89 = arith.addf %88, %87 : vector<8x384xf32>
    %90 = arith.divf %88, %89 : vector<8x384xf32>
    %91 = vector.extract_strided_slice %90 {offsets = [0, 0], sizes = [8, 128], strides = [1, 1]} : vector<8x384xf32> to vector<8x128xf32>
    %92 = vector.extract_strided_slice %90 {offsets = [0, 128], sizes = [8, 128], strides = [1, 1]} : vector<8x384xf32> to vector<8x128xf32>
    %93 = vector.extract_strided_slice %90 {offsets = [0, 256], sizes = [8, 128], strides = [1, 1]} : vector<8x384xf32> to vector<8x128xf32>
    %94 = vector.extract_strided_slice %84 {offsets = [0, 384], sizes = [8, 128], strides = [1, 1]} : vector<8x512xf32> to vector<8x128xf32>
    %95 = math.tanh %94 : vector<8x128xf32>
    %96 = arith.mulf %92, %75 : vector<8x128xf32>
    %97 = arith.mulf %91, %95 : vector<8x128xf32>
    %98 = arith.addf %96, %97 : vector<8x128xf32>
    %99 = math.tanh %98 : vector<8x128xf32>
    %100 = arith.mulf %93, %99 : vector<8x128xf32>
    %c4_i32 = arith.constant 4 : i32
    %c8_i32_32 = arith.constant 8 : i32
    %101 = arith.muli %c4_i32, %c8_i32_32 : i32
    %102 = tpu.assume_multiple %101, 8 : i32
    %103 = arith.index_cast %102 : i32 to index
    %c0_33 = arith.constant 0 : index
    %104 = vector.load %arg7[%103, %c0_33] : memref<64x512xf32, #tpu.memory_space<vmem>>, vector<8x512xf32>
    %c0_34 = arith.constant 0 : index
    %c0_35 = arith.constant 0 : index
    %105 = vector.load %arg2[%c0_34, %c0_35] : memref<128x512xf32, #tpu.memory_space<vmem>>, vector<128x512xf32>
    %cst_36 = arith.constant dense<0.000000e+00> : vector<8x512xf32>
    %106 = tpu.matmul %100, %105, %cst_36 {dimension_numbers = #tpu.dot_dimension_numbers<[1], [0], [0], [1], [0, 0, 1, 1], [], []>} : vector<8x128xf32>, vector<128x512xf32>, vector<8x512xf32> -> vector<8x512xf32>
    %107 = arith.addf %104, %106 : vector<8x512xf32>
    %108 = vector.extract_strided_slice %107 {offsets = [0, 0], sizes = [8, 384], strides = [1, 1]} : vector<8x512xf32> to vector<8x384xf32>
    %109 = arith.negf %108 : vector<8x384xf32>
    %110 = math.exp %109 : vector<8x384xf32>
    %cst_37 = arith.constant 1.000000e+00 : f32
    %111 = vector.broadcast %cst_37 : f32 to vector<8x384xf32>
    %112 = arith.addf %111, %110 : vector<8x384xf32>
    %113 = arith.divf %111, %112 : vector<8x384xf32>
    %114 = vector.extract_strided_slice %113 {offsets = [0, 0], sizes = [8, 128], strides = [1, 1]} : vector<8x384xf32> to vector<8x128xf32>
    %115 = vector.extract_strided_slice %113 {offsets = [0, 128], sizes = [8, 128], strides = [1, 1]} : vector<8x384xf32> to vector<8x128xf32>
    %116 = vector.extract_strided_slice %113 {offsets = [0, 256], sizes = [8, 128], strides = [1, 1]} : vector<8x384xf32> to vector<8x128xf32>
    %117 = vector.extract_strided_slice %107 {offsets = [0, 384], sizes = [8, 128], strides = [1, 1]} : vector<8x512xf32> to vector<8x128xf32>
    %118 = math.tanh %117 : vector<8x128xf32>
    %119 = arith.mulf %115, %98 : vector<8x128xf32>
    %120 = arith.mulf %114, %118 : vector<8x128xf32>
    %121 = arith.addf %119, %120 : vector<8x128xf32>
    %122 = math.tanh %121 : vector<8x128xf32>
    %123 = arith.mulf %116, %122 : vector<8x128xf32>
    %c5_i32 = arith.constant 5 : i32
    %c8_i32_38 = arith.constant 8 : i32
    %124 = arith.muli %c5_i32, %c8_i32_38 : i32
    %125 = tpu.assume_multiple %124, 8 : i32
    %126 = arith.index_cast %125 : i32 to index
    %c0_39 = arith.constant 0 : index
    %127 = vector.load %arg7[%126, %c0_39] : memref<64x512xf32, #tpu.memory_space<vmem>>, vector<8x512xf32>
    %c0_40 = arith.constant 0 : index
    %c0_41 = arith.constant 0 : index
    %128 = vector.load %arg2[%c0_40, %c0_41] : memref<128x512xf32, #tpu.memory_space<vmem>>, vector<128x512xf32>
    %cst_42 = arith.constant dense<0.000000e+00> : vector<8x512xf32>
    %129 = tpu.matmul %123, %128, %cst_42 {dimension_numbers = #tpu.dot_dimension_numbers<[1], [0], [0], [1], [0, 0, 1, 1], [], []>} : vector<8x128xf32>, vector<128x512xf32>, vector<8x512xf32> -> vector<8x512xf32>
    %130 = arith.addf %127, %129 : vector<8x512xf32>
    %131 = vector.extract_strided_slice %130 {offsets = [0, 0], sizes = [8, 384], strides = [1, 1]} : vector<8x512xf32> to vector<8x384xf32>
    %132 = arith.negf %131 : vector<8x384xf32>
    %133 = math.exp %132 : vector<8x384xf32>
    %cst_43 = arith.constant 1.000000e+00 : f32
    %134 = vector.broadcast %cst_43 : f32 to vector<8x384xf32>
    %135 = arith.addf %134, %133 : vector<8x384xf32>
    %136 = arith.divf %134, %135 : vector<8x384xf32>
    %137 = vector.extract_strided_slice %136 {offsets = [0, 0], sizes = [8, 128], strides = [1, 1]} : vector<8x384xf32> to vector<8x128xf32>
    %138 = vector.extract_strided_slice %136 {offsets = [0, 128], sizes = [8, 128], strides = [1, 1]} : vector<8x384xf32> to vector<8x128xf32>
    %139 = vector.extract_strided_slice %136 {offsets = [0, 256], sizes = [8, 128], strides = [1, 1]} : vector<8x384xf32> to vector<8x128xf32>
    %140 = vector.extract_strided_slice %130 {offsets = [0, 384], sizes = [8, 128], strides = [1, 1]} : vector<8x512xf32> to vector<8x128xf32>
    %141 = math.tanh %140 : vector<8x128xf32>
    %142 = arith.mulf %138, %121 : vector<8x128xf32>
    %143 = arith.mulf %137, %141 : vector<8x128xf32>
    %144 = arith.addf %142, %143 : vector<8x128xf32>
    %145 = math.tanh %144 : vector<8x128xf32>
    %146 = arith.mulf %139, %145 : vector<8x128xf32>
    %c6_i32 = arith.constant 6 : i32
    %c8_i32_44 = arith.constant 8 : i32
    %147 = arith.muli %c6_i32, %c8_i32_44 : i32
    %148 = tpu.assume_multiple %147, 8 : i32
    %149 = arith.index_cast %148 : i32 to index
    %c0_45 = arith.constant 0 : index
    %150 = vector.load %arg7[%149, %c0_45] : memref<64x512xf32, #tpu.memory_space<vmem>>, vector<8x512xf32>
    %c0_46 = arith.constant 0 : index
    %c0_47 = arith.constant 0 : index
    %151 = vector.load %arg2[%c0_46, %c0_47] : memref<128x512xf32, #tpu.memory_space<vmem>>, vector<128x512xf32>
    %cst_48 = arith.constant dense<0.000000e+00> : vector<8x512xf32>
    %152 = tpu.matmul %146, %151, %cst_48 {dimension_numbers = #tpu.dot_dimension_numbers<[1], [0], [0], [1], [0, 0, 1, 1], [], []>} : vector<8x128xf32>, vector<128x512xf32>, vector<8x512xf32> -> vector<8x512xf32>
    %153 = arith.addf %150, %152 : vector<8x512xf32>
    %154 = vector.extract_strided_slice %153 {offsets = [0, 0], sizes = [8, 384], strides = [1, 1]} : vector<8x512xf32> to vector<8x384xf32>
    %155 = arith.negf %154 : vector<8x384xf32>
    %156 = math.exp %155 : vector<8x384xf32>
    %cst_49 = arith.constant 1.000000e+00 : f32
    %157 = vector.broadcast %cst_49 : f32 to vector<8x384xf32>
    %158 = arith.addf %157, %156 : vector<8x384xf32>
    %159 = arith.divf %157, %158 : vector<8x384xf32>
    %160 = vector.extract_strided_slice %159 {offsets = [0, 0], sizes = [8, 128], strides = [1, 1]} : vector<8x384xf32> to vector<8x128xf32>
    %161 = vector.extract_strided_slice %159 {offsets = [0, 128], sizes = [8, 128], strides = [1, 1]} : vector<8x384xf32> to vector<8x128xf32>
    %162 = vector.extract_strided_slice %159 {offsets = [0, 256], sizes = [8, 128], strides = [1, 1]} : vector<8x384xf32> to vector<8x128xf32>
    %163 = vector.extract_strided_slice %153 {offsets = [0, 384], sizes = [8, 128], strides = [1, 1]} : vector<8x512xf32> to vector<8x128xf32>
    %164 = math.tanh %163 : vector<8x128xf32>
    %165 = arith.mulf %161, %144 : vector<8x128xf32>
    %166 = arith.mulf %160, %164 : vector<8x128xf32>
    %167 = arith.addf %165, %166 : vector<8x128xf32>
    %168 = math.tanh %167 : vector<8x128xf32>
    %169 = arith.mulf %162, %168 : vector<8x128xf32>
    %c7_i32 = arith.constant 7 : i32
    %c8_i32_50 = arith.constant 8 : i32
    %170 = arith.muli %c7_i32, %c8_i32_50 : i32
    %171 = tpu.assume_multiple %170, 8 : i32
    %172 = arith.index_cast %171 : i32 to index
    %c0_51 = arith.constant 0 : index
    %173 = vector.load %arg7[%172, %c0_51] : memref<64x512xf32, #tpu.memory_space<vmem>>, vector<8x512xf32>
    %c0_52 = arith.constant 0 : index
    %c0_53 = arith.constant 0 : index
    %174 = vector.load %arg2[%c0_52, %c0_53] : memref<128x512xf32, #tpu.memory_space<vmem>>, vector<128x512xf32>
    %cst_54 = arith.constant dense<0.000000e+00> : vector<8x512xf32>
    %175 = tpu.matmul %169, %174, %cst_54 {dimension_numbers = #tpu.dot_dimension_numbers<[1], [0], [0], [1], [0, 0, 1, 1], [], []>} : vector<8x128xf32>, vector<128x512xf32>, vector<8x512xf32> -> vector<8x512xf32>
    %176 = arith.addf %173, %175 : vector<8x512xf32>
    %177 = vector.extract_strided_slice %176 {offsets = [0, 0], sizes = [8, 384], strides = [1, 1]} : vector<8x512xf32> to vector<8x384xf32>
    %178 = arith.negf %177 : vector<8x384xf32>
    %179 = math.exp %178 : vector<8x384xf32>
    %cst_55 = arith.constant 1.000000e+00 : f32
    %180 = vector.broadcast %cst_55 : f32 to vector<8x384xf32>
    %181 = arith.addf %180, %179 : vector<8x384xf32>
    %182 = arith.divf %180, %181 : vector<8x384xf32>
    %183 = vector.extract_strided_slice %182 {offsets = [0, 0], sizes = [8, 128], strides = [1, 1]} : vector<8x384xf32> to vector<8x128xf32>
    %184 = vector.extract_strided_slice %182 {offsets = [0, 128], sizes = [8, 128], strides = [1, 1]} : vector<8x384xf32> to vector<8x128xf32>
    %185 = vector.extract_strided_slice %182 {offsets = [0, 256], sizes = [8, 128], strides = [1, 1]} : vector<8x384xf32> to vector<8x128xf32>
    %186 = vector.extract_strided_slice %176 {offsets = [0, 384], sizes = [8, 128], strides = [1, 1]} : vector<8x512xf32> to vector<8x128xf32>
    %187 = math.tanh %186 : vector<8x128xf32>
    %188 = arith.mulf %184, %167 : vector<8x128xf32>
    %189 = arith.mulf %183, %187 : vector<8x128xf32>
    %190 = arith.addf %188, %189 : vector<8x128xf32>
    %191 = math.tanh %190 : vector<8x128xf32>
    %192 = arith.mulf %185, %191 : vector<8x128xf32>
    %c8_i32_56 = arith.constant 8 : i32
    %c0_57 = arith.constant 0 : index
    %c0_58 = arith.constant 0 : index
    %193 = vector.load %arg4[%c0_57, %c0_58] : memref<128x128xf32, #tpu.memory_space<vmem>>, vector<128x128xf32>
    %cst_59 = arith.constant dense<0.000000e+00> : vector<8x128xf32>
    %194 = tpu.matmul %192, %193, %cst_59 {dimension_numbers = #tpu.dot_dimension_numbers<[1], [0], [0], [1], [0, 0, 1, 1], [], []>} : vector<8x128xf32>, vector<128x128xf32>, vector<8x128xf32> -> vector<8x128xf32>
    %c0_60 = arith.constant 0 : index
    %c0_61 = arith.constant 0 : index
    %195 = vector.load %arg5[%c0_60, %c0_61] : memref<1x128xf32, #tpu.memory_space<vmem>>, vector<1x128xf32>
    %196 = vector.broadcast %195 : vector<1x128xf32> to vector<8x128xf32>
    %197 = arith.addf %194, %196 : vector<8x128xf32>
    %c0_62 = arith.constant 0 : index
    %c0_63 = arith.constant 0 : index
    %198 = vector.load %arg6[%c0_62, %c0_63] : memref<8x128xf32, #tpu.memory_space<vmem>>, vector<8x128xf32>
    tpu.vector_store %arg6[%c0_62, %c0_63], %197 {strides = array<i32>} : memref<8x128xf32, #tpu.memory_space<vmem>>, vector<8x128xf32>,
    return
  }
}

</mosaic_0001>

<llo_original>
// kernel: lstm_model_forward.1
$region0: #{lstm_model_forward.1}
  #allocation0 [shape = 'u32[]', space=smem, size = 0x4, offset = 0x4, fixed_abs, tag = 'smem constant byte address 0x4 - core index']
  #allocation1 [shape = 'u32[144,128]{1,0:T(1,128)}', space=vmem, size = 0x12000, scoped, tag = 'internal scratch']
  #allocation2 [shape = 'f32[64,512]{1,0:T(8,128)}', space=vmem, size = 0x20000, scoped, tag = 'scratch operand']
  %s0 = inlined_call_operand.vmem [shape: f32[64,128], index: 0, kind: input, shape index: {}]
  %s1 = inlined_call_operand.hbm [shape: f32[128,512], index: 1, kind: input, shape index: {}]
  %s2 = inlined_call_operand.hbm [shape: f32[128,512], index: 2, kind: input, shape index: {}]
  %s3 = inlined_call_operand.hbm [shape: f32[1,512], index: 3, kind: input, shape index: {}]
  %s4 = inlined_call_operand.vmem [shape: f32[128,128], index: 4, kind: input, shape index: {}]
  %s5 = inlined_call_operand.vmem [shape: f32[1,128], index: 5, kind: input, shape index: {}]
  %s6 = inlined_call_operand.vmem [shape: f32[8,128], index: 6, kind: output, shape index: {}]
  %s7 = sld [smem:[#allocation0]]
  $region46: #{lstm_model_forward.1} parent=0
    _
  %s9 = ssub.s32 1, %s7
  %s10 = scalar_select 0, %s9, %s7
  $region1: #{lstm_model_forward.1} parent=0
    #allocation3 [shape = 'u8[262144]{0}', space=vmem, size = 0x40000, scoped, tag = 'input window, operand 1, single buffered']
    #allocation4 [shape = 's32[1]{0}', space=sflag, size = 0x4, scoped, tag = 'scoped memory for lstm_model_forward.1']
    #allocation5 [shape = 'u8[262144]{0}', space=vmem, size = 0x40000, scoped, tag = 'input window, operand 2, single buffered']
    #allocation6 [shape = 's32[1]{0}', space=sflag, size = 0x4, scoped, tag = 'scoped memory for lstm_model_forward.1']
    #allocation7 [shape = 'u8[2048]{0}', space=vmem, size = 0x800, scoped, tag = 'input window, operand 3, single buffered']
    %11 = vsyncpa [#allocation4], 0
    %12 = vsyncpa [#allocation6], 0
    // Predicated region
    $region2: #{lstm_model_forward.1} parent=1 // pred_check
      _
    $region3: #{lstm_model_forward.1} parent=1 // pred_check_branch
      %14 = sbr.rel (0) target = $region5
    $region4: #{lstm_model_forward.1} parent=1 // pred_region
      _
    $region5: #{lstm_model_forward.1} parent=1 // pred_fallthru
      _
    // Predicated region
    $region6: #{lstm_model_forward.1} parent=1 // pred_check
      _
    $region7: #{lstm_model_forward.1} parent=1 // pred_check_branch
      %16 = sbr.rel (0) target = $region9
    $region8: #{lstm_model_forward.1} parent=1 // pred_region
      %s18 = ssub.s32 8192, 8192
      %19 = vsyncadd [#allocation4], %s18
      %s20 = sshll.u32 [#allocation3], 4
      %s21 = int_to_ptr.vmem [resolvable:$true] %s20
      %26 = dma.hbm_to_vmem [thread:$0]  %s1, 8192, %s21, [#allocation4], 512, 512, 32
    $region9: #{lstm_model_forward.1} parent=1 // pred_fallthru
      _
    // Predicated region
    $region10: #{lstm_model_forward.1} parent=1 // pred_check
      _
    $region11: #{lstm_model_forward.1} parent=1 // pred_check_branch
      %28 = sbr.rel (0) target = $region13
    $region12: #{lstm_model_forward.1} parent=1 // pred_region
      %s30 = ssub.s32 8192, 8192
      %31 = vsyncadd [#allocation6], %s30
      %s32 = sshll.u32 [#allocation5], 4
      %s33 = int_to_ptr.vmem [resolvable:$true] %s32
      %38 = dma.hbm_to_vmem [thread:$0]  %s2, 8192, %s33, [#allocation6], 512, 512, 32
    $region13: #{lstm_model_forward.1} parent=1 // pred_fallthru
      _
    // Predicated region
    $region14: #{lstm_model_forward.1} parent=1 // pred_check
      _
    $region15: #{lstm_model_forward.1} parent=1 // pred_check_branch
      %40 = sbr.rel (0) target = $region17
    $region16: #{lstm_model_forward.1} parent=1 // pred_region
      %s42 = ssub.s32 64, 64
      %43 = vsyncadd [#allocation6], %s42
      %s45 = sshll.u32 [#allocation7], 4
      %s46 = int_to_ptr.vmem [resolvable:$true] %s45
      %48 = dma.hbm_to_vmem [thread:$0]  %s3, 64, %s46, [#allocation6]
    $region17: #{lstm_model_forward.1} parent=1 // pred_fallthru
      _
    // Predicated region
    $region18: #{lstm_model_forward.1} parent=1 // pred_check
      _
    $region19: #{lstm_model_forward.1} parent=1 // pred_check_branch
      %50 = sbr.rel (0) target = $region21
    $region20: #{lstm_model_forward.1} parent=1 // pred_region
      _
    $region21: #{lstm_model_forward.1} parent=1 // pred_fallthru
      _
    // Predicated region
    $region22: #{lstm_model_forward.1} parent=1 // pred_check
      _
    $region23: #{lstm_model_forward.1} parent=1 // pred_check_branch
      %52 = sbr.rel (0) target = $region25
    $region24: #{lstm_model_forward.1} parent=1 // pred_region
      _
    $region25: #{lstm_model_forward.1} parent=1 // pred_fallthru
      _
    // Predicated region
    $region26: #{lstm_model_forward.1} parent=1 // pred_check
      _
    $region27: #{lstm_model_forward.1} parent=1 // pred_check_branch
      %54 = sbr.rel (0) target = $region29
    $region28: #{lstm_model_forward.1} parent=1 // pred_region
      %55 = dma.done [#allocation4], 8192
    $region29: #{lstm_model_forward.1} parent=1 // pred_fallthru
      _
    // Predicated region
    $region30: #{lstm_model_forward.1} parent=1 // pred_check
      _
    $region31: #{lstm_model_forward.1} parent=1 // pred_check_branch
      %57 = sbr.rel (0) target = $region33
    $region32: #{lstm_model_forward.1} parent=1 // pred_region
      %58 = dma.done [#allocation6], 8192
    $region33: #{lstm_model_forward.1} parent=1 // pred_fallthru
      _
    // Predicated region
    $region34: #{lstm_model_forward.1} parent=1 // pred_check
      _
    $region35: #{lstm_model_forward.1} parent=1 // pred_check_branch
      %60 = sbr.rel (0) target = $region37
    $region36: #{lstm_model_forward.1} parent=1 // pred_region
      %61 = dma.done [#allocation6], 64
    $region37: #{lstm_model_forward.1} parent=1 // pred_fallthru
      _
    %v62 = vld [vmem:[%s0] sm:$0xff]
    %v63 = vld [vmem:[%s0 + $0x8] sm:$0xff]
    %v64 = vld [vmem:[%s0 + $0x10] sm:$0xff]
    %v65 = vld [vmem:[%s0 + $0x18] sm:$0xff]
    %v66 = vld [vmem:[%s0 + $0x20] sm:$0xff]
    %v67 = vld [vmem:[%s0 + $0x28] sm:$0xff]
    %v68 = vld [vmem:[%s0 + $0x30] sm:$0xff]
    %v69 = vld [vmem:[%s0 + $0x38] sm:$0xff]
    %v70 = vld [vmem:[#allocation3] sm:$0xff]
    %v71 = vld [vmem:[#allocation3 + $0x8] sm:$0xff]
    %v72 = vld [vmem:[#allocation3 + $0x10] sm:$0xff]
    %v73 = vld [vmem:[#allocation3 + $0x18] sm:$0xff]
    %v74 = vld [vmem:[#allocation3 + $0x20] sm:$0xff]
    %v75 = vld [vmem:[#allocation3 + $0x28] sm:$0xff]
    %v76 = vld [vmem:[#allocation3 + $0x30] sm:$0xff]
    %v77 = vld [vmem:[#allocation3 + $0x38] sm:$0xff]
    %v78 = vld [vmem:[#allocation3 + $0x40] sm:$0xff]
    %v79 = vld [vmem:[#allocation3 + $0x48] sm:$0xff]
    %v80 = vld [vmem:[#allocation3 + $0x50] sm:$0xff]
    %v81 = vld [vmem:[#allocation3 + $0x58] sm:$0xff]
    %v82 = vld [vmem:[#allocation3 + $0x60] sm:$0xff]
    %v83 = vld [vmem:[#allocation3 + $0x68] sm:$0xff]
    %v84 = vld [vmem:[#allocation3 + $0x70] sm:$0xff]
    %v85 = vld [vmem:[#allocation3 + $0x78] sm:$0xff]
    %v86 = vld [vmem:[#allocation3 + $0x80] sm:$0xff]
    %v87 = vld [vmem:[#allocation3 + $0x88] sm:$0xff]
    %v88 = vld [vmem:[#allocation3 + $0x90] sm:$0xff]
    %v89 = vld [vmem:[#allocation3 + $0x98] sm:$0xff]
    %v90 = vld [vmem:[#allocation3 + $0xa0] sm:$0xff]
    %v91 = vld [vmem:[#allocation3 + $0xa8] sm:$0xff]
    %v92 = vld [vmem:[#allocation3 + $0xb0] sm:$0xff]
    %v93 = vld [vmem:[#allocation3 + $0xb8] sm:$0xff]
    %v94 = vld [vmem:[#allocation3 + $0xc0] sm:$0xff]
    %v95 = vld [vmem:[#allocation3 + $0xc8] sm:$0xff]
    %v96 = vld [vmem:[#allocation3 + $0xd0] sm:$0xff]
    %v97 = vld [vmem:[#allocation3 + $0xd8] sm:$0xff]
    %v98 = vld [vmem:[#allocation3 + $0xe0] sm:$0xff]
    %v99 = vld [vmem:[#allocation3 + $0xe8] sm:$0xff]
    %v100 = vld [vmem:[#allocation3 + $0xf0] sm:$0xff]
    %v101 = vld [vmem:[#allocation3 + $0xf8] sm:$0xff]
    %v102 = vld [vmem:[#allocation3 + $0x100] sm:$0xff]
    %v103 = vld [vmem:[#allocation3 + $0x108] sm:$0xff]
    %v104 = vld [vmem:[#allocation3 + $0x110] sm:$0xff]
    %v105 = vld [vmem:[#allocation3 + $0x118] sm:$0xff]
    %v106 = vld [vmem:[#allocation3 + $0x120] sm:$0xff]
    %v107 = vld [vmem:[#allocation3 + $0x128] sm:$0xff]
    %v108 = vld [vmem:[#allocation3 + $0x130] sm:$0xff]
    %v109 = vld [vmem:[#allocation3 + $0x138] sm:$0xff]
    %v110 = vld [vmem:[#allocation3 + $0x140] sm:$0xff]
    %v111 = vld [vmem:[#allocation3 + $0x148] sm:$0xff]
    %v112 = vld [vmem:[#allocation3 + $0x150] sm:$0xff]
    %v113 = vld [vmem:[#allocation3 + $0x158] sm:$0xff]
    %v114 = vld [vmem:[#allocation3 + $0x160] sm:$0xff]
    %v115 = vld [vmem:[#allocation3 + $0x168] sm:$0xff]
    %v116 = vld [vmem:[#allocation3 + $0x170] sm:$0xff]
    %v117 = vld [vmem:[#allocation3 + $0x178] sm:$0xff]
    %v118 = vld [vmem:[#allocation3 + $0x180] sm:$0xff]
    %v119 = vld [vmem:[#allocation3 + $0x188] sm:$0xff]
    %v120 = vld [vmem:[#allocation3 + $0x190] sm:$0xff]
    %v121 = vld [vmem:[#allocation3 + $0x198] sm:$0xff]
    %v122 = vld [vmem:[#allocation3 + $0x1a0] sm:$0xff]
    %v123 = vld [vmem:[#allocation3 + $0x1a8] sm:$0xff]
    %v124 = vld [vmem:[#allocation3 + $0x1b0] sm:$0xff]
    %v125 = vld [vmem:[#allocation3 + $0x1b8] sm:$0xff]
    %v126 = vld [vmem:[#allocation3 + $0x1c0] sm:$0xff]
    %v127 = vld [vmem:[#allocation3 + $0x1c8] sm:$0xff]
    %v128 = vld [vmem:[#allocation3 + $0x1d0] sm:$0xff]
    %v129 = vld [vmem:[#allocation3 + $0x1d8] sm:$0xff]
    %v130 = vld [vmem:[#allocation3 + $0x1e0] sm:$0xff]
    %v131 = vld [vmem:[#allocation3 + $0x1e8] sm:$0xff]
    %v132 = vld [vmem:[#allocation3 + $0x1f0] sm:$0xff]
    %v133 = vld [vmem:[#allocation3 + $0x1f8] sm:$0xff]
    %v134 = vld [vmem:[#allocation7] sm:$0xf]
    %v136 = vlaneseq
    %v137 = vshrl.u32 %v136, 7
    %v138 = vsub.s32 0, %v137
    %v139 = vrot.slane %v134, %v138
    %v140 = vlaneseq
    %v141 = vshrl.u32 %v140, 7
    %v142 = vsub.s32 1, %v141
    %v143 = vrot.slane %v134, %v142
    %v144 = vlaneseq
    %v145 = vshrl.u32 %v144, 7
    %v146 = vsub.s32 2, %v145
    %v147 = vrot.slane %v134, %v146
    %v148 = vlaneseq
    %v149 = vshrl.u32 %v148, 7
    %v150 = vsub.s32 3, %v149
    %v151 = vrot.slane %v134, %v150
    %156 = vmatprep.subr.mxu0 %v71
    %157 = vmatpush1.msra.mxu0 %v70
    %158 = vmatprep.subr.mxu0 %v75
    %159 = vmatpush1.msra.mxu0 %v74
    %160 = vmatprep.subr.mxu0 %v79
    %161 = vmatpush1.msra.mxu0 %v78
    %162 = vmatprep.subr.mxu0 %v83
    %163 = vmatpush1.msra.mxu0 %v82
    %164 = vmatprep.subr.mxu0 %v87
    %165 = vmatpush1.msra.mxu0 %v86
    %166 = vmatprep.subr.mxu0 %v91
    %167 = vmatpush1.msra.mxu0 %v90
    %168 = vmatprep.subr.mxu0 %v95
    %169 = vmatpush1.msra.mxu0 %v94
    %170 = vmatprep.subr.mxu0 %v99
    %171 = vmatpush1.msra.mxu0 %v98
    %172 = vmatprep.subr.mxu0 %v103
    %173 = vmatpush1.msra.mxu0 %v102
    %174 = vmatprep.subr.mxu0 %v107
    %175 = vmatpush1.msra.mxu0 %v106
    %176 = vmatprep.subr.mxu0 %v111
    %177 = vmatpush1.msra.mxu0 %v110
    %178 = vmatprep.subr.mxu0 %v115
    %179 = vmatpush1.msra.mxu0 %v114
    %180 = vmatprep.subr.mxu0 %v119
    %181 = vmatpush1.msra.mxu0 %v118
    %182 = vmatprep.subr.mxu0 %v123
    %183 = vmatpush1.msra.mxu0 %v122
    %184 = vmatprep.subr.mxu0 %v127
    %185 = vmatpush1.msra.mxu0 %v126
    %186 = vmatprep.subr.mxu0 %v131
    %187 = vmatpush1.msra.mxu0 %v130
    %188 = vmatprep.subr.mxu0 0.0
    %189 = vmatpush1.msra.mxu0 0.0
    %190 = vmatprep.subr.mxu0 0.0
    %191 = vmatpush1.msra.mxu0 0.0
    %192 = vmatprep.subr.mxu0 0.0
    %193 = vmatpush1.msra.mxu0 0.0
    %194 = vmatprep.subr.mxu0 0.0
    %195 = vmatpush1.msra.mxu0 0.0
    %196 = vmatprep.subr.mxu0 0.0
    %197 = vmatpush1.msra.mxu0 0.0
    %198 = vmatprep.subr.mxu0 0.0
    %199 = vmatpush1.msra.mxu0 0.0
    %200 = vmatprep.subr.mxu0 0.0
    %201 = vmatpush1.msra.mxu0 0.0
    %202 = vmatprep.subr.mxu0 0.0
    %203 = vmatpush1.msra.mxu0 0.0
    %204 = vmatprep.subr.mxu0 0.0
    %205 = vmatpush1.msra.mxu0 0.0
    %206 = vmatprep.subr.mxu0 0.0
    %207 = vmatpush1.msra.mxu0 0.0
    %208 = vmatprep.subr.mxu0 0.0
    %209 = vmatpush1.msra.mxu0 0.0
    %210 = vmatprep.subr.mxu0 0.0
    %211 = vmatpush1.msra.mxu0 0.0
    %212 = vmatprep.subr.mxu0 0.0
    %213 = vmatpush1.msra.mxu0 0.0
    %214 = vmatprep.subr.mxu0 0.0
    %215 = vmatpush1.msra.mxu0 0.0
    %216 = vmatprep.subr.mxu0 0.0
    %217 = vmatpush1.msra.mxu0 0.0
    %218 = vmatprep.subr.mxu0 0.0
    %219 = vmatpush1.msra.mxu0 0.0
    %220 = vmatprep.mubr.f32.mxu0 0.0
    %221 = vmatmul.mubr.f32.gmra.mrb[0].mxu0 %v62
    %v222 = vpop.f32.mrb[0].mxu0
    %v223 = vadd.f32 %v139, %v222
    %v224 = vpop.f32.mrb[0].mxu0
    %v225 = vadd.f32 %v143, %v224
    %226 = vmatprep.mubr.f32.mxu0 0.0
    %227 = vmatmul.mubr.f32.gmra.mrb[0].mxu0 %v63
    %v228 = vpop.f32.mrb[0].mxu0
    %v229 = vadd.f32 %v139, %v228
    %v230 = vpop.f32.mrb[0].mxu0
    %v231 = vadd.f32 %v143, %v230
    %232 = vmatprep.mubr.f32.mxu0 0.0
    %233 = vmatmul.mubr.f32.gmra.mrb[0].mxu0 %v64
    %v234 = vpop.f32.mrb[0].mxu0
    %v235 = vadd.f32 %v139, %v234
    %v236 = vpop.f32.mrb[0].mxu0
    %v237 = vadd.f32 %v143, %v236
    %238 = vmatprep.mubr.f32.mxu0 0.0
    %239 = vmatmul.mubr.f32.gmra.mrb[0].mxu0 %v65
    %v240 = vpop.f32.mrb[0].mxu0
    %v241 = vadd.f32 %v139, %v240
    %v242 = vpop.f32.mrb[0].mxu0
    %v243 = vadd.f32 %v143, %v242
    %244 = vmatprep.mubr.f32.mxu0 0.0
    %245 = vmatmul.mubr.f32.gmra.mrb[0].mxu0 %v66
    %v246 = vpop.f32.mrb[0].mxu0
    %v247 = vadd.f32 %v139, %v246
    %v248 = vpop.f32.mrb[0].mxu0
    %v249 = vadd.f32 %v143, %v248
    %250 = vmatprep.mubr.f32.mxu0 0.0
    %251 = vmatmul.mubr.f32.gmra.mrb[0].mxu0 %v67
    %v252 = vpop.f32.mrb[0].mxu0
    %v253 = vadd.f32 %v139, %v252
    %v254 = vpop.f32.mrb[0].mxu0
    %v255 = vadd.f32 %v143, %v254
    %256 = vmatprep.mubr.f32.mxu0 0.0
    %257 = vmatmul.mubr.f32.gmra.mrb[0].mxu0 %v68
    %v258 = vpop.f32.mrb[0].mxu0
    %v259 = vadd.f32 %v139, %v258
    %v260 = vpop.f32.mrb[0].mxu0
    %v261 = vadd.f32 %v143, %v260
    %262 = vmatprep.mubr.f32.mxu0 0.0
    %263 = vmatmul.mubr.f32.gmra.mrb[0].mxu0 %v69
    %v264 = vpop.f32.mrb[0].mxu0
    %v265 = vadd.f32 %v139, %v264
    %v266 = vpop.f32.mrb[0].mxu0
    %v267 = vadd.f32 %v143, %v266
    %268 = vdwg.mxu0
    %269 = vmatprep.subr.mxu0 %v73
    %270 = vmatpush1.msra.mxu0 %v72
    %271 = vmatprep.subr.mxu0 %v77
    %272 = vmatpush1.msra.mxu0 %v76
    %273 = vmatprep.subr.mxu0 %v81
    %274 = vmatpush1.msra.mxu0 %v80
    %275 = vmatprep.subr.mxu0 %v85
    %276 = vmatpush1.msra.mxu0 %v84
    %277 = vmatprep.subr.mxu0 %v89
    %278 = vmatpush1.msra.mxu0 %v88
    %279 = vmatprep.subr.mxu0 %v93
    %280 = vmatpush1.msra.mxu0 %v92
    %281 = vmatprep.subr.mxu0 %v97
    %282 = vmatpush1.msra.mxu0 %v96
    %283 = vmatprep.subr.mxu0 %v101
    %284 = vmatpush1.msra.mxu0 %v100
    %285 = vmatprep.subr.mxu0 %v105
    %286 = vmatpush1.msra.mxu0 %v104
    %287 = vmatprep.subr.mxu0 %v109
    %288 = vmatpush1.msra.mxu0 %v108
    %289 = vmatprep.subr.mxu0 %v113
    %290 = vmatpush1.msra.mxu0 %v112
    %291 = vmatprep.subr.mxu0 %v117
    %292 = vmatpush1.msra.mxu0 %v116
    %293 = vmatprep.subr.mxu0 %v121
    %294 = vmatpush1.msra.mxu0 %v120
    %295 = vmatprep.subr.mxu0 %v125
    %296 = vmatpush1.msra.mxu0 %v124
    %297 = vmatprep.subr.mxu0 %v129
    %298 = vmatpush1.msra.mxu0 %v128
    %299 = vmatprep.subr.mxu0 %v133
    %300 = vmatpush1.msra.mxu0 %v132
    %301 = vmatprep.subr.mxu0 0.0
    %302 = vmatpush1.msra.mxu0 0.0
    %303 = vmatprep.subr.mxu0 0.0
    %304 = vmatpush1.msra.mxu0 0.0
    %305 = vmatprep.subr.mxu0 0.0
    %306 = vmatpush1.msra.mxu0 0.0
    %307 = vmatprep.subr.mxu0 0.0
    %308 = vmatpush1.msra.mxu0 0.0
    %309 = vmatprep.subr.mxu0 0.0
    %310 = vmatpush1.msra.mxu0 0.0
    %311 = vmatprep.subr.mxu0 0.0
    %312 = vmatpush1.msra.mxu0 0.0
    %313 = vmatprep.subr.mxu0 0.0
    %314 = vmatpush1.msra.mxu0 0.0
    %315 = vmatprep.subr.mxu0 0.0
    %316 = vmatpush1.msra.mxu0 0.0
    %317 = vmatprep.subr.mxu0 0.0
    %318 = vmatpush1.msra.mxu0 0.0
    %319 = vmatprep.subr.mxu0 0.0
    %320 = vmatpush1.msra.mxu0 0.0
    %321 = vmatprep.subr.mxu0 0.0
    %322 = vmatpush1.msra.mxu0 0.0
    %323 = vmatprep.subr.mxu0 0.0
    %324 = vmatpush1.msra.mxu0 0.0
    %325 = vmatprep.subr.mxu0 0.0
    %326 = vmatpush1.msra.mxu0 0.0
    %327 = vmatprep.subr.mxu0 0.0
    %328 = vmatpush1.msra.mxu0 0.0
    %329 = vmatprep.subr.mxu0 0.0
    %330 = vmatpush1.msra.mxu0 0.0
    %331 = vmatprep.subr.mxu0 0.0
    %332 = vmatpush1.msra.mxu0 0.0
    %333 = vmatprep.mubr.f32.mxu0 0.0
    %334 = vmatmul.mubr.f32.gmra.mrb[0].mxu0 %v62
    %v335 = vpop.f32.mrb[0].mxu0
    %v336 = vadd.f32 %v147, %v335
    %v337 = vpop.f32.mrb[0].mxu0
    %v338 = vadd.f32 %v151, %v337
    %339 = vmatprep.mubr.f32.mxu0 0.0
    %340 = vmatmul.mubr.f32.gmra.mrb[0].mxu0 %v63
    %v341 = vpop.f32.mrb[0].mxu0
    %v342 = vadd.f32 %v147, %v341
    %v343 = vpop.f32.mrb[0].mxu0
    %v344 = vadd.f32 %v151, %v343
    %345 = vmatprep.mubr.f32.mxu0 0.0
    %346 = vmatmul.mubr.f32.gmra.mrb[0].mxu0 %v64
    %v347 = vpop.f32.mrb[0].mxu0
    %v348 = vadd.f32 %v147, %v347
    %v349 = vpop.f32.mrb[0].mxu0
    %v350 = vadd.f32 %v151, %v349
    %351 = vmatprep.mubr.f32.mxu0 0.0
    %352 = vmatmul.mubr.f32.gmra.mrb[0].mxu0 %v65
    %v353 = vpop.f32.mrb[0].mxu0
    %v354 = vadd.f32 %v147, %v353
    %v355 = vpop.f32.mrb[0].mxu0
    %v356 = vadd.f32 %v151, %v355
    %357 = vmatprep.mubr.f32.mxu0 0.0
    %358 = vmatmul.mubr.f32.gmra.mrb[0].mxu0 %v66
    %v359 = vpop.f32.mrb[0].mxu0
    %v360 = vadd.f32 %v147, %v359
    %v361 = vpop.f32.mrb[0].mxu0
    %v362 = vadd.f32 %v151, %v361
    %363 = vmatprep.mubr.f32.mxu0 0.0
    %364 = vmatmul.mubr.f32.gmra.mrb[0].mxu0 %v67
    %v365 = vpop.f32.mrb[0].mxu0
    %v366 = vadd.f32 %v147, %v365
    %v367 = vpop.f32.mrb[0].mxu0
    %v368 = vadd.f32 %v151, %v367
    %369 = vmatprep.mubr.f32.mxu0 0.0
    %370 = vmatmul.mubr.f32.gmra.mrb[0].mxu0 %v68
    %v371 = vpop.f32.mrb[0].mxu0
    %v372 = vadd.f32 %v147, %v371
    %v373 = vpop.f32.mrb[0].mxu0
    %v374 = vadd.f32 %v151, %v373
    %375 = vmatprep.mubr.f32.mxu0 0.0
    %376 = vmatmul.mubr.f32.gmra.mrb[0].mxu0 %v69
    %v377 = vpop.f32.mrb[0].mxu0
    %v378 = vadd.f32 %v147, %v377
    %v379 = vpop.f32.mrb[0].mxu0
    %v380 = vadd.f32 %v151, %v379
    %381 = vdwg.mxu0
    %382 = vst [vmem:[#allocation2] sm:$0xff] %v223
    %383 = vst [vmem:[#allocation2 + $0x8] sm:$0xff] %v225
    %384 = vst [vmem:[#allocation2 + $0x10] sm:$0xff] %v336
    %385 = vst [vmem:[#allocation2 + $0x18] sm:$0xff] %v338
    %386 = vst [vmem:[#allocation2 + $0x20] sm:$0xff] %v229
    %387 = vst [vmem:[#allocation2 + $0x28] sm:$0xff] %v231
    %388 = vst [vmem:[#allocation2 + $0x30] sm:$0xff] %v342
    %389 = vst [vmem:[#allocation2 + $0x38] sm:$0xff] %v344
    %390 = vst [vmem:[#allocation2 + $0x40] sm:$0xff] %v235
    %391 = vst [vmem:[#allocation2 + $0x48] sm:$0xff] %v237
    %392 = vst [vmem:[#allocation2 + $0x50] sm:$0xff] %v348
    %393 = vst [vmem:[#allocation2 + $0x58] sm:$0xff] %v350
    %394 = vst [vmem:[#allocation2 + $0x60] sm:$0xff] %v241
    %395 = vst [vmem:[#allocation2 + $0x68] sm:$0xff] %v243
    %396 = vst [vmem:[#allocation2 + $0x70] sm:$0xff] %v354
    %397 = vst [vmem:[#allocation2 + $0x78] sm:$0xff] %v356
    %398 = vst [vmem:[#allocation2 + $0x80] sm:$0xff] %v247
    %399 = vst [vmem:[#allocation2 + $0x88] sm:$0xff] %v249
    %400 = vst [vmem:[#allocation2 + $0x90] sm:$0xff] %v360
    %401 = vst [vmem:[#allocation2 + $0x98] sm:$0xff] %v362
    %402 = vst [vmem:[#allocation2 + $0xa0] sm:$0xff] %v253
    %403 = vst [vmem:[#allocation2 + $0xa8] sm:$0xff] %v255
    %404 = vst [vmem:[#allocation2 + $0xb0] sm:$0xff] %v366
    %405 = vst [vmem:[#allocation2 + $0xb8] sm:$0xff] %v368
    %406 = vst [vmem:[#allocation2 + $0xc0] sm:$0xff] %v259
    %407 = vst [vmem:[#allocation2 + $0xc8] sm:$0xff] %v261
    %408 = vst [vmem:[#allocation2 + $0xd0] sm:$0xff] %v372
    %409 = vst [vmem:[#allocation2 + $0xd8] sm:$0xff] %v374
    %410 = vst [vmem:[#allocation2 + $0xe0] sm:$0xff] %v265
    %411 = vst [vmem:[#allocation2 + $0xe8] sm:$0xff] %v267
    %412 = vst [vmem:[#allocation2 + $0xf0] sm:$0xff] %v378
    %413 = vst [vmem:[#allocation2 + $0xf8] sm:$0xff] %v380
    %s414 = smul.u32 0, 4
    %s415 = smul.addr %s414, 8
    %s416 = scalar_lea.vmem [#allocation2], %s415
    %v417 = vld [vmem:[%s416] sm:$0xff]
    %v418 = vld [vmem:[%s416 + $0x8] sm:$0xff]
    %v419 = vld [vmem:[%s416 + $0x10] sm:$0xff]
    %v420 = vld [vmem:[%s416 + $0x18] sm:$0xff]
    %v421 = vld [vmem:[#allocation5] sm:$0xff]
    %v422 = vld [vmem:[#allocation5 + $0x8] sm:$0xff]
    %v423 = vld [vmem:[#allocation5 + $0x10] sm:$0xff]
    %v424 = vld [vmem:[#allocation5 + $0x18] sm:$0xff]
    %v425 = vld [vmem:[#allocation5 + $0x20] sm:$0xff]
    %v426 = vld [vmem:[#allocation5 + $0x28] sm:$0xff]
    %v427 = vld [vmem:[#allocation5 + $0x30] sm:$0xff]
    %v428 = vld [vmem:[#allocation5 + $0x38] sm:$0xff]
    %v429 = vld [vmem:[#allocation5 + $0x40] sm:$0xff]
    %v430 = vld [vmem:[#allocation5 + $0x48] sm:$0xff]
    %v431 = vld [vmem:[#allocation5 + $0x50] sm:$0xff]
    %v432 = vld [vmem:[#allocation5 + $0x58] sm:$0xff]
    %v433 = vld [vmem:[#allocation5 + $0x60] sm:$0xff]
    %v434 = vld [vmem:[#allocation5 + $0x68] sm:$0xff]
    %v435 = vld [vmem:[#allocation5 + $0x70] sm:$0xff]
    %v436 = vld [vmem:[#allocation5 + $0x78] sm:$0xff]
    %v437 = vld [vmem:[#allocation5 + $0x80] sm:$0xff]
    %v438 = vld [vmem:[#allocation5 + $0x88] sm:$0xff]
    %v439 = vld [vmem:[#allocation5 + $0x90] sm:$0xff]
    %v440 = vld [vmem:[#allocation5 + $0x98] sm:$0xff]
    %v441 = vld [vmem:[#allocation5 + $0xa0] sm:$0xff]
    %v442 = vld [vmem:[#allocation5 + $0xa8] sm:$0xff]
    %v443 = vld [vmem:[#allocation5 + $0xb0] sm:$0xff]
    %v444 = vld [vmem:[#allocation5 + $0xb8] sm:$0xff]
    %v445 = vld [vmem:[#allocation5 + $0xc0] sm:$0xff]
    %v446 = vld [vmem:[#allocation5 + $0xc8] sm:$0xff]
    %v447 = vld [vmem:[#allocation5 + $0xd0] sm:$0xff]
    %v448 = vld [vmem:[#allocation5 + $0xd8] sm:$0xff]
    %v449 = vld [vmem:[#allocation5 + $0xe0] sm:$0xff]
    %v450 = vld [vmem:[#allocation5 + $0xe8] sm:$0xff]
    %v451 = vld [vmem:[#allocation5 + $0xf0] sm:$0xff]
    %v452 = vld [vmem:[#allocation5 + $0xf8] sm:$0xff]
    %v453 = vld [vmem:[#allocation5 + $0x100] sm:$0xff]
    %v454 = vld [vmem:[#allocation5 + $0x108] sm:$0xff]
    %v455 = vld [vmem:[#allocation5 + $0x110] sm:$0xff]
    %v456 = vld [vmem:[#allocation5 + $0x118] sm:$0xff]
    %v457 = vld [vmem:[#allocation5 + $0x120] sm:$0xff]
    %v458 = vld [vmem:[#allocation5 + $0x128] sm:$0xff]
    %v459 = vld [vmem:[#allocation5 + $0x130] sm:$0xff]
    %v460 = vld [vmem:[#allocation5 + $0x138] sm:$0xff]
    %v461 = vld [vmem:[#allocation5 + $0x140] sm:$0xff]
    %v462 = vld [vmem:[#allocation5 + $0x148] sm:$0xff]
    %v463 = vld [vmem:[#allocation5 + $0x150] sm:$0xff]
    %v464 = vld [vmem:[#allocation5 + $0x158] sm:$0xff]
    %v465 = vld [vmem:[#allocation5 + $0x160] sm:$0xff]
    %v466 = vld [vmem:[#allocation5 + $0x168] sm:$0xff]
    %v467 = vld [vmem:[#allocation5 + $0x170] sm:$0xff]
    %v468 = vld [vmem:[#allocation5 + $0x178] sm:$0xff]
    %v469 = vld [vmem:[#allocation5 + $0x180] sm:$0xff]
    %v470 = vld [vmem:[#allocation5 + $0x188] sm:$0xff]
    %v471 = vld [vmem:[#allocation5 + $0x190] sm:$0xff]
    %v472 = vld [vmem:[#allocation5 + $0x198] sm:$0xff]
    %v473 = vld [vmem:[#allocation5 + $0x1a0] sm:$0xff]
    %v474 = vld [vmem:[#allocation5 + $0x1a8] sm:$0xff]
    %v475 = vld [vmem:[#allocation5 + $0x1b0] sm:$0xff]
    %v476 = vld [vmem:[#allocation5 + $0x1b8] sm:$0xff]
    %v477 = vld [vmem:[#allocation5 + $0x1c0] sm:$0xff]
    %v478 = vld [vmem:[#allocation5 + $0x1c8] sm:$0xff]
    %v479 = vld [vmem:[#allocation5 + $0x1d0] sm:$0xff]
    %v480 = vld [vmem:[#allocation5 + $0x1d8] sm:$0xff]
    %v481 = vld [vmem:[#allocation5 + $0x1e0] sm:$0xff]
    %v482 = vld [vmem:[#allocation5 + $0x1e8] sm:$0xff]
    %v483 = vld [vmem:[#allocation5 + $0x1f0] sm:$0xff]
    %v484 = vld [vmem:[#allocation5 + $0x1f8] sm:$0xff]
    %485 = vmatprep.subr.mxu0 %v422
    %486 = vmatpush1.msra.mxu0 %v421
    %487 = vmatprep.subr.mxu0 %v426
    %488 = vmatpush1.msra.mxu0 %v425
    %489 = vmatprep.subr.mxu0 %v430
    %490 = vmatpush1.msra.mxu0 %v429
    %491 = vmatprep.subr.mxu0 %v434
    %492 = vmatpush1.msra.mxu0 %v433
    %493 = vmatprep.subr.mxu0 %v438
    %494 = vmatpush1.msra.mxu0 %v437
    %495 = vmatprep.subr.mxu0 %v442
    %496 = vmatpush1.msra.mxu0 %v441
    %497 = vmatprep.subr.mxu0 %v446
    %498 = vmatpush1.msra.mxu0 %v445
    %499 = vmatprep.subr.mxu0 %v450
    %500 = vmatpush1.msra.mxu0 %v449
    %501 = vmatprep.subr.mxu0 %v454
    %502 = vmatpush1.msra.mxu0 %v453
    %503 = vmatprep.subr.mxu0 %v458
    %504 = vmatpush1.msra.mxu0 %v457
    %505 = vmatprep.subr.mxu0 %v462
    %506 = vmatpush1.msra.mxu0 %v461
    %507 = vmatprep.subr.mxu0 %v466
    %508 = vmatpush1.msra.mxu0 %v465
    %509 = vmatprep.subr.mxu0 %v470
    %510 = vmatpush1.msra.mxu0 %v469
    %511 = vmatprep.subr.mxu0 %v474
    %512 = vmatpush1.msra.mxu0 %v473
    %513 = vmatprep.subr.mxu0 %v478
    %514 = vmatpush1.msra.mxu0 %v477
    %515 = vmatprep.subr.mxu0 %v482
    %516 = vmatpush1.msra.mxu0 %v481
    %517 = vmatprep.subr.mxu0 0.0
    %518 = vmatpush1.msra.mxu0 0.0
    %519 = vmatprep.subr.mxu0 0.0
    %520 = vmatpush1.msra.mxu0 0.0
    %521 = vmatprep.subr.mxu0 0.0
    %522 = vmatpush1.msra.mxu0 0.0
    %523 = vmatprep.subr.mxu0 0.0
    %524 = vmatpush1.msra.mxu0 0.0
    %525 = vmatprep.subr.mxu0 0.0
    %526 = vmatpush1.msra.mxu0 0.0
    %527 = vmatprep.subr.mxu0 0.0
    %528 = vmatpush1.msra.mxu0 0.0
    %529 = vmatprep.subr.mxu0 0.0
    %530 = vmatpush1.msra.mxu0 0.0
    %531 = vmatprep.subr.mxu0 0.0
    %532 = vmatpush1.msra.mxu0 0.0
    %533 = vmatprep.subr.mxu0 0.0
    %534 = vmatpush1.msra.mxu0 0.0
    %535 = vmatprep.subr.mxu0 0.0
    %536 = vmatpush1.msra.mxu0 0.0
    %537 = vmatprep.subr.mxu0 0.0
    %538 = vmatpush1.msra.mxu0 0.0
    %539 = vmatprep.subr.mxu0 0.0
    %540 = vmatpush1.msra.mxu0 0.0
    %541 = vmatprep.subr.mxu0 0.0
    %542 = vmatpush1.msra.mxu0 0.0
    %543 = vmatprep.subr.mxu0 0.0
    %544 = vmatpush1.msra.mxu0 0.0
    %545 = vmatprep.subr.mxu0 0.0
    %546 = vmatpush1.msra.mxu0 0.0
    %547 = vmatprep.subr.mxu0 0.0
    %548 = vmatpush1.msra.mxu0 0.0
    %549 = vmatprep.mubr.f32.mxu0 0.0
    %550 = vmatmul.mubr.f32.gmra.mrb[0].mxu0 0.0
    %v551 = vpop.f32.mrb[0].mxu0
    %v552 = vadd.f32 0.0, %v551
    %v553 = vpop.f32.mrb[0].mxu0
    %v554 = vadd.f32 0.0, %v553
    %555 = vdwg.mxu0
    %556 = vmatprep.subr.mxu0 %v424
    %557 = vmatpush1.msra.mxu0 %v423
    %558 = vmatprep.subr.mxu0 %v428
    %559 = vmatpush1.msra.mxu0 %v427
    %560 = vmatprep.subr.mxu0 %v432
    %561 = vmatpush1.msra.mxu0 %v431
    %562 = vmatprep.subr.mxu0 %v436
    %563 = vmatpush1.msra.mxu0 %v435
    %564 = vmatprep.subr.mxu0 %v440
    %565 = vmatpush1.msra.mxu0 %v439
    %566 = vmatprep.subr.mxu0 %v444
    %567 = vmatpush1.msra.mxu0 %v443
    %568 = vmatprep.subr.mxu0 %v448
    %569 = vmatpush1.msra.mxu0 %v447
    %570 = vmatprep.subr.mxu0 %v452
    %571 = vmatpush1.msra.mxu0 %v451
    %572 = vmatprep.subr.mxu0 %v456
    %573 = vmatpush1.msra.mxu0 %v455
    %574 = vmatprep.subr.mxu0 %v460
    %575 = vmatpush1.msra.mxu0 %v459
    %576 = vmatprep.subr.mxu0 %v464
    %577 = vmatpush1.msra.mxu0 %v463
    %578 = vmatprep.subr.mxu0 %v468
    %579 = vmatpush1.msra.mxu0 %v467
    %580 = vmatprep.subr.mxu0 %v472
    %581 = vmatpush1.msra.mxu0 %v471
    %582 = vmatprep.subr.mxu0 %v476
    %583 = vmatpush1.msra.mxu0 %v475
    %584 = vmatprep.subr.mxu0 %v480
    %585 = vmatpush1.msra.mxu0 %v479
    %586 = vmatprep.subr.mxu0 %v484
    %587 = vmatpush1.msra.mxu0 %v483
    %588 = vmatprep.subr.mxu0 0.0
    %589 = vmatpush1.msra.mxu0 0.0
    %590 = vmatprep.subr.mxu0 0.0
    %591 = vmatpush1.msra.mxu0 0.0
    %592 = vmatprep.subr.mxu0 0.0
    %593 = vmatpush1.msra.mxu0 0.0
    %594 = vmatprep.subr.mxu0 0.0
    %595 = vmatpush1.msra.mxu0 0.0
    %596 = vmatprep.subr.mxu0 0.0
    %597 = vmatpush1.msra.mxu0 0.0
    %598 = vmatprep.subr.mxu0 0.0
    %599 = vmatpush1.msra.mxu0 0.0
    %600 = vmatprep.subr.mxu0 0.0
    %601 = vmatpush1.msra.mxu0 0.0
    %602 = vmatprep.subr.mxu0 0.0
    %603 = vmatpush1.msra.mxu0 0.0
    %604 = vmatprep.subr.mxu0 0.0
    %605 = vmatpush1.msra.mxu0 0.0
    %606 = vmatprep.subr.mxu0 0.0
    %607 = vmatpush1.msra.mxu0 0.0
    %608 = vmatprep.subr.mxu0 0.0
    %609 = vmatpush1.msra.mxu0 0.0
    %610 = vmatprep.subr.mxu0 0.0
    %611 = vmatpush1.msra.mxu0 0.0
    %612 = vmatprep.subr.mxu0 0.0
    %613 = vmatpush1.msra.mxu0 0.0
    %614 = vmatprep.subr.mxu0 0.0
    %615 = vmatpush1.msra.mxu0 0.0
    %616 = vmatprep.subr.mxu0 0.0
    %617 = vmatpush1.msra.mxu0 0.0
    %618 = vmatprep.subr.mxu0 0.0
    %619 = vmatpush1.msra.mxu0 0.0
    %620 = vmatprep.mubr.f32.mxu0 0.0
    %621 = vmatmul.mubr.f32.gmra.mrb[0].mxu0 0.0
    %v622 = vpop.f32.mrb[0].mxu0
    %v623 = vadd.f32 0.0, %v622
    %v624 = vpop.f32.mrb[0].mxu0
    %v625 = vadd.f32 0.0, %v624
    %626 = vdwg.mxu0
    %v627 = vadd.f32 %v417, %v552
    %v628 = vadd.f32 %v418, %v554
    %v629 = vadd.f32 %v419, %v623
    %v630 = vadd.f32 %v420, %v625
    %v631 = vxor.u32 %v627, 2147483648
    %v632 = vxor.u32 %v628, 2147483648
    %v633 = vxor.u32 %v629, 2147483648
    %v634 = vmul.f32 %v631, 1.442695
    %v635 = vpow.pop %v634
    %v636 = vmul.f32 %v632, 1.442695
    %v637 = vpow.pop %v636
    %v638 = vmul.f32 %v633, 1.442695
    %v639 = vpow.pop %v638
    %v640 = vadd.f32 %v635, 1.0
    %v641 = vadd.f32 %v637, 1.0
    %v642 = vadd.f32 %v639, 1.0
    %v643 = vrcp.pop %v640
    %v644 = vmul.f32 1.0, %v643
    %v645 = vrcp.pop %v641
    %v646 = vmul.f32 1.0, %v645
    %v647 = vrcp.pop %v642
    %v648 = vmul.f32 1.0, %v647
    %v649 = vtanh.pop %v630
    %v650 = vmul.f32 %v646, 0.0
    %v651 = vmul.f32 %v644, %v649
    %v652 = vadd.f32 %v650, %v651
    %v653 = vtanh.pop %v652
    %v654 = vmul.f32 %v648, %v653
    %s655 = smul.u32 1, 4
    %s656 = smul.addr %s655, 8
    %s657 = scalar_lea.vmem [#allocation2], %s656
    %v658 = vld [vmem:[%s657] sm:$0xff]
    %v659 = vld [vmem:[%s657 + $0x8] sm:$0xff]
    %v660 = vld [vmem:[%s657 + $0x10] sm:$0xff]
    %v661 = vld [vmem:[%s657 + $0x18] sm:$0xff]
    %662 = vmatprep.subr.mxu0 %v422
    %663 = vmatpush1.msra.mxu0 %v421
    %664 = vmatprep.subr.mxu0 %v426
    %665 = vmatpush1.msra.mxu0 %v425
    %666 = vmatprep.subr.mxu0 %v430
    %667 = vmatpush1.msra.mxu0 %v429
    %668 = vmatprep.subr.mxu0 %v434
    %669 = vmatpush1.msra.mxu0 %v433
    %670 = vmatprep.subr.mxu0 %v438
    %671 = vmatpush1.msra.mxu0 %v437
    %672 = vmatprep.subr.mxu0 %v442
    %673 = vmatpush1.msra.mxu0 %v441
    %674 = vmatprep.subr.mxu0 %v446
    %675 = vmatpush1.msra.mxu0 %v445
    %676 = vmatprep.subr.mxu0 %v450
    %677 = vmatpush1.msra.mxu0 %v449
    %678 = vmatprep.subr.mxu0 %v454
    %679 = vmatpush1.msra.mxu0 %v453
    %680 = vmatprep.subr.mxu0 %v458
    %681 = vmatpush1.msra.mxu0 %v457
    %682 = vmatprep.subr.mxu0 %v462
    %683 = vmatpush1.msra.mxu0 %v461
    %684 = vmatprep.subr.mxu0 %v466
    %685 = vmatpush1.msra.mxu0 %v465
    %686 = vmatprep.subr.mxu0 %v470
    %687 = vmatpush1.msra.mxu0 %v469
    %688 = vmatprep.subr.mxu0 %v474
    %689 = vmatpush1.msra.mxu0 %v473
    %690 = vmatprep.subr.mxu0 %v478
    %691 = vmatpush1.msra.mxu0 %v477
    %692 = vmatprep.subr.mxu0 %v482
    %693 = vmatpush1.msra.mxu0 %v481
    %694 = vmatprep.subr.mxu0 0.0
    %695 = vmatpush1.msra.mxu0 0.0
    %696 = vmatprep.subr.mxu0 0.0
    %697 = vmatpush1.msra.mxu0 0.0
    %698 = vmatprep.subr.mxu0 0.0
    %699 = vmatpush1.msra.mxu0 0.0
    %700 = vmatprep.subr.mxu0 0.0
    %701 = vmatpush1.msra.mxu0 0.0
    %702 = vmatprep.subr.mxu0 0.0
    %703 = vmatpush1.msra.mxu0 0.0
    %704 = vmatprep.subr.mxu0 0.0
    %705 = vmatpush1.msra.mxu0 0.0
    %706 = vmatprep.subr.mxu0 0.0
    %707 = vmatpush1.msra.mxu0 0.0
    %708 = vmatprep.subr.mxu0 0.0
    %709 = vmatpush1.msra.mxu0 0.0
    %710 = vmatprep.subr.mxu0 0.0
    %711 = vmatpush1.msra.mxu0 0.0
    %712 = vmatprep.subr.mxu0 0.0
    %713 = vmatpush1.msra.mxu0 0.0
    %714 = vmatprep.subr.mxu0 0.0
    %715 = vmatpush1.msra.mxu0 0.0
    %716 = vmatprep.subr.mxu0 0.0
    %717 = vmatpush1.msra.mxu0 0.0
    %718 = vmatprep.subr.mxu0 0.0
    %719 = vmatpush1.msra.mxu0 0.0
    %720 = vmatprep.subr.mxu0 0.0
    %721 = vmatpush1.msra.mxu0 0.0
    %722 = vmatprep.subr.mxu0 0.0
    %723 = vmatpush1.msra.mxu0 0.0
    %724 = vmatprep.subr.mxu0 0.0
    %725 = vmatpush1.msra.mxu0 0.0
    %726 = vmatprep.mubr.f32.mxu0 0.0
    %727 = vmatmul.mubr.f32.gmra.mrb[0].mxu0 %v654
    %v728 = vpop.f32.mrb[0].mxu0
    %v729 = vadd.f32 0.0, %v728
    %v730 = vpop.f32.mrb[0].mxu0
    %v731 = vadd.f32 0.0, %v730
    %732 = vdwg.mxu0
    %733 = vmatprep.subr.mxu0 %v424
    %734 = vmatpush1.msra.mxu0 %v423
    %735 = vmatprep.subr.mxu0 %v428
    %736 = vmatpush1.msra.mxu0 %v427
    %737 = vmatprep.subr.mxu0 %v432
    %738 = vmatpush1.msra.mxu0 %v431
    %739 = vmatprep.subr.mxu0 %v436
    %740 = vmatpush1.msra.mxu0 %v435
    %741 = vmatprep.subr.mxu0 %v440
    %742 = vmatpush1.msra.mxu0 %v439
    %743 = vmatprep.subr.mxu0 %v444
    %744 = vmatpush1.msra.mxu0 %v443
    %745 = vmatprep.subr.mxu0 %v448
    %746 = vmatpush1.msra.mxu0 %v447
    %747 = vmatprep.subr.mxu0 %v452
    %748 = vmatpush1.msra.mxu0 %v451
    %749 = vmatprep.subr.mxu0 %v456
    %750 = vmatpush1.msra.mxu0 %v455
    %751 = vmatprep.subr.mxu0 %v460
    %752 = vmatpush1.msra.mxu0 %v459
    %753 = vmatprep.subr.mxu0 %v464
    %754 = vmatpush1.msra.mxu0 %v463
    %755 = vmatprep.subr.mxu0 %v468
    %756 = vmatpush1.msra.mxu0 %v467
    %757 = vmatprep.subr.mxu0 %v472
    %758 = vmatpush1.msra.mxu0 %v471
    %759 = vmatprep.subr.mxu0 %v476
    %760 = vmatpush1.msra.mxu0 %v475
    %761 = vmatprep.subr.mxu0 %v480
    %762 = vmatpush1.msra.mxu0 %v479
    %763 = vmatprep.subr.mxu0 %v484
    %764 = vmatpush1.msra.mxu0 %v483
    %765 = vmatprep.subr.mxu0 0.0
    %766 = vmatpush1.msra.mxu0 0.0
    %767 = vmatprep.subr.mxu0 0.0
    %768 = vmatpush1.msra.mxu0 0.0
    %769 = vmatprep.subr.mxu0 0.0
    %770 = vmatpush1.msra.mxu0 0.0
    %771 = vmatprep.subr.mxu0 0.0
    %772 = vmatpush1.msra.mxu0 0.0
    %773 = vmatprep.subr.mxu0 0.0
    %774 = vmatpush1.msra.mxu0 0.0
    %775 = vmatprep.subr.mxu0 0.0
    %776 = vmatpush1.msra.mxu0 0.0
    %777 = vmatprep.subr.mxu0 0.0
    %778 = vmatpush1.msra.mxu0 0.0
    %779 = vmatprep.subr.mxu0 0.0
    %780 = vmatpush1.msra.mxu0 0.0
    %781 = vmatprep.subr.mxu0 0.0
    %782 = vmatpush1.msra.mxu0 0.0
    %783 = vmatprep.subr.mxu0 0.0
    %784 = vmatpush1.msra.mxu0 0.0
    %785 = vmatprep.subr.mxu0 0.0
    %786 = vmatpush1.msra.mxu0 0.0
    %787 = vmatprep.subr.mxu0 0.0
    %788 = vmatpush1.msra.mxu0 0.0
    %789 = vmatprep.subr.mxu0 0.0
    %790 = vmatpush1.msra.mxu0 0.0
    %791 = vmatprep.subr.mxu0 0.0
    %792 = vmatpush1.msra.mxu0 0.0
    %793 = vmatprep.subr.mxu0 0.0
    %794 = vmatpush1.msra.mxu0 0.0
    %795 = vmatprep.subr.mxu0 0.0
    %796 = vmatpush1.msra.mxu0 0.0
    %797 = vmatprep.mubr.f32.mxu0 0.0
    %798 = vmatmul.mubr.f32.gmra.mrb[0].mxu0 %v654
    %v799 = vpop.f32.mrb[0].mxu0
    %v800 = vadd.f32 0.0, %v799
    %v801 = vpop.f32.mrb[0].mxu0
    %v802 = vadd.f32 0.0, %v801
    %803 = vdwg.mxu0
    %v804 = vadd.f32 %v658, %v729
    %v805 = vadd.f32 %v659, %v731
    %v806 = vadd.f32 %v660, %v800
    %v807 = vadd.f32 %v661, %v802
    %v808 = vxor.u32 %v804, 2147483648
    %v809 = vxor.u32 %v805, 2147483648
    %v810 = vxor.u32 %v806, 2147483648
    %v811 = vmul.f32 %v808, 1.442695
    %v812 = vpow.pop %v811
    %v813 = vmul.f32 %v809, 1.442695
    %v814 = vpow.pop %v813
    %v815 = vmul.f32 %v810, 1.442695
    %v816 = vpow.pop %v815
    %v817 = vadd.f32 %v812, 1.0
    %v818 = vadd.f32 %v814, 1.0
    %v819 = vadd.f32 %v816, 1.0
    %v820 = vrcp.pop %v817
    %v821 = vmul.f32 1.0, %v820
    %v822 = vrcp.pop %v818
    %v823 = vmul.f32 1.0, %v822
    %v824 = vrcp.pop %v819
    %v825 = vmul.f32 1.0, %v824
    %v826 = vtanh.pop %v807
    %v827 = vmul.f32 %v823, %v652
    %v828 = vmul.f32 %v821, %v826
    %v829 = vadd.f32 %v827, %v828
    %v830 = vtanh.pop %v829
    %v831 = vmul.f32 %v825, %v830
    %s832 = smul.u32 2, 4
    %s833 = smul.addr %s832, 8
    %s834 = scalar_lea.vmem [#allocation2], %s833
    %v835 = vld [vmem:[%s834] sm:$0xff]
    %v836 = vld [vmem:[%s834 + $0x8] sm:$0xff]
    %v837 = vld [vmem:[%s834 + $0x10] sm:$0xff]
    %v838 = vld [vmem:[%s834 + $0x18] sm:$0xff]
    %839 = vmatprep.subr.mxu0 %v422
    %840 = vmatpush1.msra.mxu0 %v421
    %841 = vmatprep.subr.mxu0 %v426
    %842 = vmatpush1.msra.mxu0 %v425
    %843 = vmatprep.subr.mxu0 %v430
    %844 = vmatpush1.msra.mxu0 %v429
    %845 = vmatprep.subr.mxu0 %v434
    %846 = vmatpush1.msra.mxu0 %v433
    %847 = vmatprep.subr.mxu0 %v438
    %848 = vmatpush1.msra.mxu0 %v437
    %849 = vmatprep.subr.mxu0 %v442
    %850 = vmatpush1.msra.mxu0 %v441
    %851 = vmatprep.subr.mxu0 %v446
    %852 = vmatpush1.msra.mxu0 %v445
    %853 = vmatprep.subr.mxu0 %v450
    %854 = vmatpush1.msra.mxu0 %v449
    %855 = vmatprep.subr.mxu0 %v454
    %856 = vmatpush1.msra.mxu0 %v453
    %857 = vmatprep.subr.mxu0 %v458
    %858 = vmatpush1.msra.mxu0 %v457
    %859 = vmatprep.subr.mxu0 %v462
    %860 = vmatpush1.msra.mxu0 %v461
    %861 = vmatprep.subr.mxu0 %v466
    %862 = vmatpush1.msra.mxu0 %v465
    %863 = vmatprep.subr.mxu0 %v470
    %864 = vmatpush1.msra.mxu0 %v469
    %865 = vmatprep.subr.mxu0 %v474
    %866 = vmatpush1.msra.mxu0 %v473
    %867 = vmatprep.subr.mxu0 %v478
    %868 = vmatpush1.msra.mxu0 %v477
    %869 = vmatprep.subr.mxu0 %v482
    %870 = vmatpush1.msra.mxu0 %v481
    %871 = vmatprep.subr.mxu0 0.0
    %872 = vmatpush1.msra.mxu0 0.0
    %873 = vmatprep.subr.mxu0 0.0
    %874 = vmatpush1.msra.mxu0 0.0
    %875 = vmatprep.subr.mxu0 0.0
    %876 = vmatpush1.msra.mxu0 0.0
    %877 = vmatprep.subr.mxu0 0.0
    %878 = vmatpush1.msra.mxu0 0.0
    %879 = vmatprep.subr.mxu0 0.0
    %880 = vmatpush1.msra.mxu0 0.0
    %881 = vmatprep.subr.mxu0 0.0
    %882 = vmatpush1.msra.mxu0 0.0
    %883 = vmatprep.subr.mxu0 0.0
    %884 = vmatpush1.msra.mxu0 0.0
    %885 = vmatprep.subr.mxu0 0.0
    %886 = vmatpush1.msra.mxu0 0.0
    %887 = vmatprep.subr.mxu0 0.0
    %888 = vmatpush1.msra.mxu0 0.0
    %889 = vmatprep.subr.mxu0 0.0
    %890 = vmatpush1.msra.mxu0 0.0
    %891 = vmatprep.subr.mxu0 0.0
    %892 = vmatpush1.msra.mxu0 0.0
    %893 = vmatprep.subr.mxu0 0.0
    %894 = vmatpush1.msra.mxu0 0.0
    %895 = vmatprep.subr.mxu0 0.0
    %896 = vmatpush1.msra.mxu0 0.0
    %897 = vmatprep.subr.mxu0 0.0
    %898 = vmatpush1.msra.mxu0 0.0
    %899 = vmatprep.subr.mxu0 0.0
    %900 = vmatpush1.msra.mxu0 0.0
    %901 = vmatprep.subr.mxu0 0.0
    %902 = vmatpush1.msra.mxu0 0.0
    %903 = vmatprep.mubr.f32.mxu0 0.0
    %904 = vmatmul.mubr.f32.gmra.mrb[0].mxu0 %v831
    %v905 = vpop.f32.mrb[0].mxu0
    %v906 = vadd.f32 0.0, %v905
    %v907 = vpop.f32.mrb[0].mxu0
    %v908 = vadd.f32 0.0, %v907
    %909 = vdwg.mxu0
    %910 = vmatprep.subr.mxu0 %v424
    %911 = vmatpush1.msra.mxu0 %v423
    %912 = vmatprep.subr.mxu0 %v428
    %913 = vmatpush1.msra.mxu0 %v427
    %914 = vmatprep.subr.mxu0 %v432
    %915 = vmatpush1.msra.mxu0 %v431
    %916 = vmatprep.subr.mxu0 %v436
    %917 = vmatpush1.msra.mxu0 %v435
    %918 = vmatprep.subr.mxu0 %v440
    %919 = vmatpush1.msra.mxu0 %v439
    %920 = vmatprep.subr.mxu0 %v444
    %921 = vmatpush1.msra.mxu0 %v443
    %922 = vmatprep.subr.mxu0 %v448
    %923 = vmatpush1.msra.mxu0 %v447
    %924 = vmatprep.subr.mxu0 %v452
    %925 = vmatpush1.msra.mxu0 %v451
    %926 = vmatprep.subr.mxu0 %v456
    %927 = vmatpush1.msra.mxu0 %v455
    %928 = vmatprep.subr.mxu0 %v460
    %929 = vmatpush1.msra.mxu0 %v459
    %930 = vmatprep.subr.mxu0 %v464
    %931 = vmatpush1.msra.mxu0 %v463
    %932 = vmatprep.subr.mxu0 %v468
    %933 = vmatpush1.msra.mxu0 %v467
    %934 = vmatprep.subr.mxu0 %v472
    %935 = vmatpush1.msra.mxu0 %v471
    %936 = vmatprep.subr.mxu0 %v476
    %937 = vmatpush1.msra.mxu0 %v475
    %938 = vmatprep.subr.mxu0 %v480
    %939 = vmatpush1.msra.mxu0 %v479
    %940 = vmatprep.subr.mxu0 %v484
    %941 = vmatpush1.msra.mxu0 %v483
    %942 = vmatprep.subr.mxu0 0.0
    %943 = vmatpush1.msra.mxu0 0.0
    %944 = vmatprep.subr.mxu0 0.0
    %945 = vmatpush1.msra.mxu0 0.0
    %946 = vmatprep.subr.mxu0 0.0
    %947 = vmatpush1.msra.mxu0 0.0
    %948 = vmatprep.subr.mxu0 0.0
    %949 = vmatpush1.msra.mxu0 0.0
    %950 = vmatprep.subr.mxu0 0.0
    %951 = vmatpush1.msra.mxu0 0.0
    %952 = vmatprep.subr.mxu0 0.0
    %953 = vmatpush1.msra.mxu0 0.0
    %954 = vmatprep.subr.mxu0 0.0
    %955 = vmatpush1.msra.mxu0 0.0
    %956 = vmatprep.subr.mxu0 0.0
    %957 = vmatpush1.msra.mxu0 0.0
    %958 = vmatprep.subr.mxu0 0.0
    %959 = vmatpush1.msra.mxu0 0.0
    %960 = vmatprep.subr.mxu0 0.0
    %961 = vmatpush1.msra.mxu0 0.0
    %962 = vmatprep.subr.mxu0 0.0
    %963 = vmatpush1.msra.mxu0 0.0
    %964 = vmatprep.subr.mxu0 0.0
    %965 = vmatpush1.msra.mxu0 0.0
    %966 = vmatprep.subr.mxu0 0.0
    %967 = vmatpush1.msra.mxu0 0.0
    %968 = vmatprep.subr.mxu0 0.0
    %969 = vmatpush1.msra.mxu0 0.0
    %970 = vmatprep.subr.mxu0 0.0
    %971 = vmatpush1.msra.mxu0 0.0
    %972 = vmatprep.subr.mxu0 0.0
    %973 = vmatpush1.msra.mxu0 0.0
    %974 = vmatprep.mubr.f32.mxu0 0.0
    %975 = vmatmul.mubr.f32.gmra.mrb[0].mxu0 %v831
    %v976 = vpop.f32.mrb[0].mxu0
    %v977 = vadd.f32 0.0, %v976
    %v978 = vpop.f32.mrb[0].mxu0
    %v979 = vadd.f32 0.0, %v978
    %980 = vdwg.mxu0
    %v981 = vadd.f32 %v835, %v906
    %v982 = vadd.f32 %v836, %v908
    %v983 = vadd.f32 %v837, %v977
    %v984 = vadd.f32 %v838, %v979
    %v985 = vxor.u32 %v981, 2147483648
    %v986 = vxor.u32 %v982, 2147483648
    %v987 = vxor.u32 %v983, 2147483648
    %v988 = vmul.f32 %v985, 1.442695
    %v989 = vpow.pop %v988
    %v990 = vmul.f32 %v986, 1.442695
    %v991 = vpow.pop %v990
    %v992 = vmul.f32 %v987, 1.442695
    %v993 = vpow.pop %v992
    %v994 = vadd.f32 %v989, 1.0
    %v995 = vadd.f32 %v991, 1.0
    %v996 = vadd.f32 %v993, 1.0
    %v997 = vrcp.pop %v994
    %v998 = vmul.f32 1.0, %v997
    %v999 = vrcp.pop %v995
    %v1000 = vmul.f32 1.0, %v999
    %v1001 = vrcp.pop %v996
    %v1002 = vmul.f32 1.0, %v1001
    %v1003 = vtanh.pop %v984
    %v1004 = vmul.f32 %v1000, %v829
    %v1005 = vmul.f32 %v998, %v1003
    %v1006 = vadd.f32 %v1004, %v1005
    %v1007 = vtanh.pop %v1006
    %v1008 = vmul.f32 %v1002, %v1007
    %s1009 = smul.u32 3, 4
    %s1010 = smul.addr %s1009, 8
    %s1011 = scalar_lea.vmem [#allocation2], %s1010
    %v1012 = vld [vmem:[%s1011] sm:$0xff]
    %v1013 = vld [vmem:[%s1011 + $0x8] sm:$0xff]
    %v1014 = vld [vmem:[%s1011 + $0x10] sm:$0xff]
    %v1015 = vld [vmem:[%s1011 + $0x18] sm:$0xff]
    %1016 = vmatprep.subr.mxu0 %v422
    %1017 = vmatpush1.msra.mxu0 %v421
    %1018 = vmatprep.subr.mxu0 %v426
    %1019 = vmatpush1.msra.mxu0 %v425
    %1020 = vmatprep.subr.mxu0 %v430
    %1021 = vmatpush1.msra.mxu0 %v429
    %1022 = vmatprep.subr.mxu0 %v434
    %1023 = vmatpush1.msra.mxu0 %v433
    %1024 = vmatprep.subr.mxu0 %v438
    %1025 = vmatpush1.msra.mxu0 %v437
    %1026 = vmatprep.subr.mxu0 %v442
    %1027 = vmatpush1.msra.mxu0 %v441
    %1028 = vmatprep.subr.mxu0 %v446
    %1029 = vmatpush1.msra.mxu0 %v445
    %1030 = vmatprep.subr.mxu0 %v450
    %1031 = vmatpush1.msra.mxu0 %v449
    %1032 = vmatprep.subr.mxu0 %v454
    %1033 = vmatpush1.msra.mxu0 %v453
    %1034 = vmatprep.subr.mxu0 %v458
    %1035 = vmatpush1.msra.mxu0 %v457
    %1036 = vmatprep.subr.mxu0 %v462
    %1037 = vmatpush1.msra.mxu0 %v461
    %1038 = vmatprep.subr.mxu0 %v466
    %1039 = vmatpush1.msra.mxu0 %v465
    %1040 = vmatprep.subr.mxu0 %v470
    %1041 = vmatpush1.msra.mxu0 %v469
    %1042 = vmatprep.subr.mxu0 %v474
    %1043 = vmatpush1.msra.mxu0 %v473
    %1044 = vmatprep.subr.mxu0 %v478
    %1045 = vmatpush1.msra.mxu0 %v477
    %1046 = vmatprep.subr.mxu0 %v482
    %1047 = vmatpush1.msra.mxu0 %v481
    %1048 = vmatprep.subr.mxu0 0.0
    %1049 = vmatpush1.msra.mxu0 0.0
    %1050 = vmatprep.subr.mxu0 0.0
    %1051 = vmatpush1.msra.mxu0 0.0
    %1052 = vmatprep.subr.mxu0 0.0
    %1053 = vmatpush1.msra.mxu0 0.0
    %1054 = vmatprep.subr.mxu0 0.0
    %1055 = vmatpush1.msra.mxu0 0.0
    %1056 = vmatprep.subr.mxu0 0.0
    %1057 = vmatpush1.msra.mxu0 0.0
    %1058 = vmatprep.subr.mxu0 0.0
    %1059 = vmatpush1.msra.mxu0 0.0
    %1060 = vmatprep.subr.mxu0 0.0
    %1061 = vmatpush1.msra.mxu0 0.0
    %1062 = vmatprep.subr.mxu0 0.0
    %1063 = vmatpush1.msra.mxu0 0.0
    %1064 = vmatprep.subr.mxu0 0.0
    %1065 = vmatpush1.msra.mxu0 0.0
    %1066 = vmatprep.subr.mxu0 0.0
    %1067 = vmatpush1.msra.mxu0 0.0
    %1068 = vmatprep.subr.mxu0 0.0
    %1069 = vmatpush1.msra.mxu0 0.0
    %1070 = vmatprep.subr.mxu0 0.0
    %1071 = vmatpush1.msra.mxu0 0.0
    %1072 = vmatprep.subr.mxu0 0.0
    %1073 = vmatpush1.msra.mxu0 0.0
    %1074 = vmatprep.subr.mxu0 0.0
    %1075 = vmatpush1.msra.mxu0 0.0
    %1076 = vmatprep.subr.mxu0 0.0
    %1077 = vmatpush1.msra.mxu0 0.0
    %1078 = vmatprep.subr.mxu0 0.0
    %1079 = vmatpush1.msra.mxu0 0.0
    %1080 = vmatprep.mubr.f32.mxu0 0.0
    %1081 = vmatmul.mubr.f32.gmra.mrb[0].mxu0 %v1008
    %v1082 = vpop.f32.mrb[0].mxu0
    %v1083 = vadd.f32 0.0, %v1082
    %v1084 = vpop.f32.mrb[0].mxu0
    %v1085 = vadd.f32 0.0, %v1084
    %1086 = vdwg.mxu0
    %1087 = vmatprep.subr.mxu0 %v424
    %1088 = vmatpush1.msra.mxu0 %v423
    %1089 = vmatprep.subr.mxu0 %v428
    %1090 = vmatpush1.msra.mxu0 %v427
    %1091 = vmatprep.subr.mxu0 %v432
    %1092 = vmatpush1.msra.mxu0 %v431
    %1093 = vmatprep.subr.mxu0 %v436
    %1094 = vmatpush1.msra.mxu0 %v435
    %1095 = vmatprep.subr.mxu0 %v440
    %1096 = vmatpush1.msra.mxu0 %v439
    %1097 = vmatprep.subr.mxu0 %v444
    %1098 = vmatpush1.msra.mxu0 %v443
    %1099 = vmatprep.subr.mxu0 %v448
    %1100 = vmatpush1.msra.mxu0 %v447
    %1101 = vmatprep.subr.mxu0 %v452
    %1102 = vmatpush1.msra.mxu0 %v451
    %1103 = vmatprep.subr.mxu0 %v456
    %1104 = vmatpush1.msra.mxu0 %v455
    %1105 = vmatprep.subr.mxu0 %v460
    %1106 = vmatpush1.msra.mxu0 %v459
    %1107 = vmatprep.subr.mxu0 %v464
    %1108 = vmatpush1.msra.mxu0 %v463
    %1109 = vmatprep.subr.mxu0 %v468
    %1110 = vmatpush1.msra.mxu0 %v467
    %1111 = vmatprep.subr.mxu0 %v472
    %1112 = vmatpush1.msra.mxu0 %v471
    %1113 = vmatprep.subr.mxu0 %v476
    %1114 = vmatpush1.msra.mxu0 %v475
    %1115 = vmatprep.subr.mxu0 %v480
    %1116 = vmatpush1.msra.mxu0 %v479
    %1117 = vmatprep.subr.mxu0 %v484
    %1118 = vmatpush1.msra.mxu0 %v483
    %1119 = vmatprep.subr.mxu0 0.0
    %1120 = vmatpush1.msra.mxu0 0.0
    %1121 = vmatprep.subr.mxu0 0.0
    %1122 = vmatpush1.msra.mxu0 0.0
    %1123 = vmatprep.subr.mxu0 0.0
    %1124 = vmatpush1.msra.mxu0 0.0
    %1125 = vmatprep.subr.mxu0 0.0
    %1126 = vmatpush1.msra.mxu0 0.0
    %1127 = vmatprep.subr.mxu0 0.0
    %1128 = vmatpush1.msra.mxu0 0.0
    %1129 = vmatprep.subr.mxu0 0.0
    %1130 = vmatpush1.msra.mxu0 0.0
    %1131 = vmatprep.subr.mxu0 0.0
    %1132 = vmatpush1.msra.mxu0 0.0
    %1133 = vmatprep.subr.mxu0 0.0
    %1134 = vmatpush1.msra.mxu0 0.0
    %1135 = vmatprep.subr.mxu0 0.0
    %1136 = vmatpush1.msra.mxu0 0.0
    %1137 = vmatprep.subr.mxu0 0.0
    %1138 = vmatpush1.msra.mxu0 0.0
    %1139 = vmatprep.subr.mxu0 0.0
    %1140 = vmatpush1.msra.mxu0 0.0
    %1141 = vmatprep.subr.mxu0 0.0
    %1142 = vmatpush1.msra.mxu0 0.0
    %1143 = vmatprep.subr.mxu0 0.0
    %1144 = vmatpush1.msra.mxu0 0.0
    %1145 = vmatprep.subr.mxu0 0.0
    %1146 = vmatpush1.msra.mxu0 0.0
    %1147 = vmatprep.subr.mxu0 0.0
    %1148 = vmatpush1.msra.mxu0 0.0
    %1149 = vmatprep.subr.mxu0 0.0
    %1150 = vmatpush1.msra.mxu0 0.0
    %1151 = vmatprep.mubr.f32.mxu0 0.0
    %1152 = vmatmul.mubr.f32.gmra.mrb[0].mxu0 %v1008
    %v1153 = vpop.f32.mrb[0].mxu0
    %v1154 = vadd.f32 0.0, %v1153
    %v1155 = vpop.f32.mrb[0].mxu0
    %v1156 = vadd.f32 0.0, %v1155
    %1157 = vdwg.mxu0
    %v1158 = vadd.f32 %v1012, %v1083
    %v1159 = vadd.f32 %v1013, %v1085
    %v1160 = vadd.f32 %v1014, %v1154
    %v1161 = vadd.f32 %v1015, %v1156
    %v1162 = vxor.u32 %v1158, 2147483648
    %v1163 = vxor.u32 %v1159, 2147483648
    %v1164 = vxor.u32 %v1160, 2147483648
    %v1165 = vmul.f32 %v1162, 1.442695
    %v1166 = vpow.pop %v1165
    %v1167 = vmul.f32 %v1163, 1.442695
    %v1168 = vpow.pop %v1167
    %v1169 = vmul.f32 %v1164, 1.442695
    %v1170 = vpow.pop %v1169
    %v1171 = vadd.f32 %v1166, 1.0
    %v1172 = vadd.f32 %v1168, 1.0
    %v1173 = vadd.f32 %v1170, 1.0
    %v1174 = vrcp.pop %v1171
    %v1175 = vmul.f32 1.0, %v1174
    %v1176 = vrcp.pop %v1172
    %v1177 = vmul.f32 1.0, %v1176
    %v1178 = vrcp.pop %v1173
    %v1179 = vmul.f32 1.0, %v1178
    %v1180 = vtanh.pop %v1161
    %v1181 = vmul.f32 %v1177, %v1006
    %v1182 = vmul.f32 %v1175, %v1180
    %v1183 = vadd.f32 %v1181, %v1182
    %v1184 = vtanh.pop %v1183
    %v1185 = vmul.f32 %v1179, %v1184
    %s1186 = smul.u32 4, 4
    %s1187 = smul.addr %s1186, 8
    %s1188 = scalar_lea.vmem [#allocation2], %s1187
    %v1189 = vld [vmem:[%s1188] sm:$0xff]
    %v1190 = vld [vmem:[%s1188 + $0x8] sm:$0xff]
    %v1191 = vld [vmem:[%s1188 + $0x10] sm:$0xff]
    %v1192 = vld [vmem:[%s1188 + $0x18] sm:$0xff]
    %1193 = vmatprep.subr.mxu0 %v422
    %1194 = vmatpush1.msra.mxu0 %v421
    %1195 = vmatprep.subr.mxu0 %v426
    %1196 = vmatpush1.msra.mxu0 %v425
    %1197 = vmatprep.subr.mxu0 %v430
    %1198 = vmatpush1.msra.mxu0 %v429
    %1199 = vmatprep.subr.mxu0 %v434
    %1200 = vmatpush1.msra.mxu0 %v433
    %1201 = vmatprep.subr.mxu0 %v438
    %1202 = vmatpush1.msra.mxu0 %v437
    %1203 = vmatprep.subr.mxu0 %v442
    %1204 = vmatpush1.msra.mxu0 %v441
    %1205 = vmatprep.subr.mxu0 %v446
    %1206 = vmatpush1.msra.mxu0 %v445
    %1207 = vmatprep.subr.mxu0 %v450
    %1208 = vmatpush1.msra.mxu0 %v449
    %1209 = vmatprep.subr.mxu0 %v454
    %1210 = vmatpush1.msra.mxu0 %v453
    %1211 = vmatprep.subr.mxu0 %v458
    %1212 = vmatpush1.msra.mxu0 %v457
    %1213 = vmatprep.subr.mxu0 %v462
    %1214 = vmatpush1.msra.mxu0 %v461
    %1215 = vmatprep.subr.mxu0 %v466
    %1216 = vmatpush1.msra.mxu0 %v465
    %1217 = vmatprep.subr.mxu0 %v470
    %1218 = vmatpush1.msra.mxu0 %v469
    %1219 = vmatprep.subr.mxu0 %v474
    %1220 = vmatpush1.msra.mxu0 %v473
    %1221 = vmatprep.subr.mxu0 %v478
    %1222 = vmatpush1.msra.mxu0 %v477
    %1223 = vmatprep.subr.mxu0 %v482
    %1224 = vmatpush1.msra.mxu0 %v481
    %1225 = vmatprep.subr.mxu0 0.0
    %1226 = vmatpush1.msra.mxu0 0.0
    %1227 = vmatprep.subr.mxu0 0.0
    %1228 = vmatpush1.msra.mxu0 0.0
    %1229 = vmatprep.subr.mxu0 0.0
    %1230 = vmatpush1.msra.mxu0 0.0
    %1231 = vmatprep.subr.mxu0 0.0
    %1232 = vmatpush1.msra.mxu0 0.0
    %1233 = vmatprep.subr.mxu0 0.0
    %1234 = vmatpush1.msra.mxu0 0.0
    %1235 = vmatprep.subr.mxu0 0.0
    %1236 = vmatpush1.msra.mxu0 0.0
    %1237 = vmatprep.subr.mxu0 0.0
    %1238 = vmatpush1.msra.mxu0 0.0
    %1239 = vmatprep.subr.mxu0 0.0
    %1240 = vmatpush1.msra.mxu0 0.0
    %1241 = vmatprep.subr.mxu0 0.0
    %1242 = vmatpush1.msra.mxu0 0.0
    %1243 = vmatprep.subr.mxu0 0.0
    %1244 = vmatpush1.msra.mxu0 0.0
    %1245 = vmatprep.subr.mxu0 0.0
    %1246 = vmatpush1.msra.mxu0 0.0
    %1247 = vmatprep.subr.mxu0 0.0
    %1248 = vmatpush1.msra.mxu0 0.0
    %1249 = vmatprep.subr.mxu0 0.0
    %1250 = vmatpush1.msra.mxu0 0.0
    %1251 = vmatprep.subr.mxu0 0.0
    %1252 = vmatpush1.msra.mxu0 0.0
    %1253 = vmatprep.subr.mxu0 0.0
    %1254 = vmatpush1.msra.mxu0 0.0
    %1255 = vmatprep.subr.mxu0 0.0
    %1256 = vmatpush1.msra.mxu0 0.0
    %1257 = vmatprep.mubr.f32.mxu0 0.0
    %1258 = vmatmul.mubr.f32.gmra.mrb[0].mxu0 %v1185
    %v1259 = vpop.f32.mrb[0].mxu0
    %v1260 = vadd.f32 0.0, %v1259
    %v1261 = vpop.f32.mrb[0].mxu0
    %v1262 = vadd.f32 0.0, %v1261
    %1263 = vdwg.mxu0
    %1264 = vmatprep.subr.mxu0 %v424
    %1265 = vmatpush1.msra.mxu0 %v423
    %1266 = vmatprep.subr.mxu0 %v428
    %1267 = vmatpush1.msra.mxu0 %v427
    %1268 = vmatprep.subr.mxu0 %v432
    %1269 = vmatpush1.msra.mxu0 %v431
    %1270 = vmatprep.subr.mxu0 %v436
    %1271 = vmatpush1.msra.mxu0 %v435
    %1272 = vmatprep.subr.mxu0 %v440
    %1273 = vmatpush1.msra.mxu0 %v439
    %1274 = vmatprep.subr.mxu0 %v444
    %1275 = vmatpush1.msra.mxu0 %v443
    %1276 = vmatprep.subr.mxu0 %v448
    %1277 = vmatpush1.msra.mxu0 %v447
    %1278 = vmatprep.subr.mxu0 %v452
    %1279 = vmatpush1.msra.mxu0 %v451
    %1280 = vmatprep.subr.mxu0 %v456
    %1281 = vmatpush1.msra.mxu0 %v455
    %1282 = vmatprep.subr.mxu0 %v460
    %1283 = vmatpush1.msra.mxu0 %v459
    %1284 = vmatprep.subr.mxu0 %v464
    %1285 = vmatpush1.msra.mxu0 %v463
    %1286 = vmatprep.subr.mxu0 %v468
    %1287 = vmatpush1.msra.mxu0 %v467
    %1288 = vmatprep.subr.mxu0 %v472
    %1289 = vmatpush1.msra.mxu0 %v471
    %1290 = vmatprep.subr.mxu0 %v476
    %1291 = vmatpush1.msra.mxu0 %v475
    %1292 = vmatprep.subr.mxu0 %v480
    %1293 = vmatpush1.msra.mxu0 %v479
    %1294 = vmatprep.subr.mxu0 %v484
    %1295 = vmatpush1.msra.mxu0 %v483
    %1296 = vmatprep.subr.mxu0 0.0
    %1297 = vmatpush1.msra.mxu0 0.0
    %1298 = vmatprep.subr.mxu0 0.0
    %1299 = vmatpush1.msra.mxu0 0.0
    %1300 = vmatprep.subr.mxu0 0.0
    %1301 = vmatpush1.msra.mxu0 0.0
    %1302 = vmatprep.subr.mxu0 0.0
    %1303 = vmatpush1.msra.mxu0 0.0
    %1304 = vmatprep.subr.mxu0 0.0
    %1305 = vmatpush1.msra.mxu0 0.0
    %1306 = vmatprep.subr.mxu0 0.0
    %1307 = vmatpush1.msra.mxu0 0.0
    %1308 = vmatprep.subr.mxu0 0.0
    %1309 = vmatpush1.msra.mxu0 0.0
    %1310 = vmatprep.subr.mxu0 0.0
    %1311 = vmatpush1.msra.mxu0 0.0
    %1312 = vmatprep.subr.mxu0 0.0
    %1313 = vmatpush1.msra.mxu0 0.0
    %1314 = vmatprep.subr.mxu0 0.0
    %1315 = vmatpush1.msra.mxu0 0.0
    %1316 = vmatprep.subr.mxu0 0.0
    %1317 = vmatpush1.msra.mxu0 0.0
    %1318 = vmatprep.subr.mxu0 0.0
    %1319 = vmatpush1.msra.mxu0 0.0
    %1320 = vmatprep.subr.mxu0 0.0
    %1321 = vmatpush1.msra.mxu0 0.0
    %1322 = vmatprep.subr.mxu0 0.0
    %1323 = vmatpush1.msra.mxu0 0.0
    %1324 = vmatprep.subr.mxu0 0.0
    %1325 = vmatpush1.msra.mxu0 0.0
    %1326 = vmatprep.subr.mxu0 0.0
    %1327 = vmatpush1.msra.mxu0 0.0
    %1328 = vmatprep.mubr.f32.mxu0 0.0
    %1329 = vmatmul.mubr.f32.gmra.mrb[0].mxu0 %v1185
    %v1330 = vpop.f32.mrb[0].mxu0
    %v1331 = vadd.f32 0.0, %v1330
    %v1332 = vpop.f32.mrb[0].mxu0
    %v1333 = vadd.f32 0.0, %v1332
    %1334 = vdwg.mxu0
    %v1335 = vadd.f32 %v1189, %v1260
    %v1336 = vadd.f32 %v1190, %v1262
    %v1337 = vadd.f32 %v1191, %v1331
    %v1338 = vadd.f32 %v1192, %v1333
    %v1339 = vxor.u32 %v1335, 2147483648
    %v1340 = vxor.u32 %v1336, 2147483648
    %v1341 = vxor.u32 %v1337, 2147483648
    %v1342 = vmul.f32 %v1339, 1.442695
    %v1343 = vpow.pop %v1342
    %v1344 = vmul.f32 %v1340, 1.442695
    %v1345 = vpow.pop %v1344
    %v1346 = vmul.f32 %v1341, 1.442695
    %v1347 = vpow.pop %v1346
    %v1348 = vadd.f32 %v1343, 1.0
    %v1349 = vadd.f32 %v1345, 1.0
    %v1350 = vadd.f32 %v1347, 1.0
    %v1351 = vrcp.pop %v1348
    %v1352 = vmul.f32 1.0, %v1351
    %v1353 = vrcp.pop %v1349
    %v1354 = vmul.f32 1.0, %v1353
    %v1355 = vrcp.pop %v1350
    %v1356 = vmul.f32 1.0, %v1355
    %v1357 = vtanh.pop %v1338
    %v1358 = vmul.f32 %v1354, %v1183
    %v1359 = vmul.f32 %v1352, %v1357
    %v1360 = vadd.f32 %v1358, %v1359
    %v1361 = vtanh.pop %v1360
    %v1362 = vmul.f32 %v1356, %v1361
    %s1363 = smul.u32 5, 4
    %s1364 = smul.addr %s1363, 8
    %s1365 = scalar_lea.vmem [#allocation2], %s1364
    %v1366 = vld [vmem:[%s1365] sm:$0xff]
    %v1367 = vld [vmem:[%s1365 + $0x8] sm:$0xff]
    %v1368 = vld [vmem:[%s1365 + $0x10] sm:$0xff]
    %v1369 = vld [vmem:[%s1365 + $0x18] sm:$0xff]
    %1370 = vmatprep.subr.mxu0 %v422
    %1371 = vmatpush1.msra.mxu0 %v421
    %1372 = vmatprep.subr.mxu0 %v426
    %1373 = vmatpush1.msra.mxu0 %v425
    %1374 = vmatprep.subr.mxu0 %v430
    %1375 = vmatpush1.msra.mxu0 %v429
    %1376 = vmatprep.subr.mxu0 %v434
    %1377 = vmatpush1.msra.mxu0 %v433
    %1378 = vmatprep.subr.mxu0 %v438
    %1379 = vmatpush1.msra.mxu0 %v437
    %1380 = vmatprep.subr.mxu0 %v442
    %1381 = vmatpush1.msra.mxu0 %v441
    %1382 = vmatprep.subr.mxu0 %v446
    %1383 = vmatpush1.msra.mxu0 %v445
    %1384 = vmatprep.subr.mxu0 %v450
    %1385 = vmatpush1.msra.mxu0 %v449
    %1386 = vmatprep.subr.mxu0 %v454
    %1387 = vmatpush1.msra.mxu0 %v453
    %1388 = vmatprep.subr.mxu0 %v458
    %1389 = vmatpush1.msra.mxu0 %v457
    %1390 = vmatprep.subr.mxu0 %v462
    %1391 = vmatpush1.msra.mxu0 %v461
    %1392 = vmatprep.subr.mxu0 %v466
    %1393 = vmatpush1.msra.mxu0 %v465
    %1394 = vmatprep.subr.mxu0 %v470
    %1395 = vmatpush1.msra.mxu0 %v469
    %1396 = vmatprep.subr.mxu0 %v474
    %1397 = vmatpush1.msra.mxu0 %v473
    %1398 = vmatprep.subr.mxu0 %v478
    %1399 = vmatpush1.msra.mxu0 %v477
    %1400 = vmatprep.subr.mxu0 %v482
    %1401 = vmatpush1.msra.mxu0 %v481
    %1402 = vmatprep.subr.mxu0 0.0
    %1403 = vmatpush1.msra.mxu0 0.0
    %1404 = vmatprep.subr.mxu0 0.0
    %1405 = vmatpush1.msra.mxu0 0.0
    %1406 = vmatprep.subr.mxu0 0.0
    %1407 = vmatpush1.msra.mxu0 0.0
    %1408 = vmatprep.subr.mxu0 0.0
    %1409 = vmatpush1.msra.mxu0 0.0
    %1410 = vmatprep.subr.mxu0 0.0
    %1411 = vmatpush1.msra.mxu0 0.0
    %1412 = vmatprep.subr.mxu0 0.0
    %1413 = vmatpush1.msra.mxu0 0.0
    %1414 = vmatprep.subr.mxu0 0.0
    %1415 = vmatpush1.msra.mxu0 0.0
    %1416 = vmatprep.subr.mxu0 0.0
    %1417 = vmatpush1.msra.mxu0 0.0
    %1418 = vmatprep.subr.mxu0 0.0
    %1419 = vmatpush1.msra.mxu0 0.0
    %1420 = vmatprep.subr.mxu0 0.0
    %1421 = vmatpush1.msra.mxu0 0.0
    %1422 = vmatprep.subr.mxu0 0.0
    %1423 = vmatpush1.msra.mxu0 0.0
    %1424 = vmatprep.subr.mxu0 0.0
    %1425 = vmatpush1.msra.mxu0 0.0
    %1426 = vmatprep.subr.mxu0 0.0
    %1427 = vmatpush1.msra.mxu0 0.0
    %1428 = vmatprep.subr.mxu0 0.0
    %1429 = vmatpush1.msra.mxu0 0.0
    %1430 = vmatprep.subr.mxu0 0.0
    %1431 = vmatpush1.msra.mxu0 0.0
    %1432 = vmatprep.subr.mxu0 0.0
    %1433 = vmatpush1.msra.mxu0 0.0
    %1434 = vmatprep.mubr.f32.mxu0 0.0
    %1435 = vmatmul.mubr.f32.gmra.mrb[0].mxu0 %v1362
    %v1436 = vpop.f32.mrb[0].mxu0
    %v1437 = vadd.f32 0.0, %v1436
    %v1438 = vpop.f32.mrb[0].mxu0
    %v1439 = vadd.f32 0.0, %v1438
    %1440 = vdwg.mxu0
    %1441 = vmatprep.subr.mxu0 %v424
    %1442 = vmatpush1.msra.mxu0 %v423
    %1443 = vmatprep.subr.mxu0 %v428
    %1444 = vmatpush1.msra.mxu0 %v427
    %1445 = vmatprep.subr.mxu0 %v432
    %1446 = vmatpush1.msra.mxu0 %v431
    %1447 = vmatprep.subr.mxu0 %v436
    %1448 = vmatpush1.msra.mxu0 %v435
    %1449 = vmatprep.subr.mxu0 %v440
    %1450 = vmatpush1.msra.mxu0 %v439
    %1451 = vmatprep.subr.mxu0 %v444
    %1452 = vmatpush1.msra.mxu0 %v443
    %1453 = vmatprep.subr.mxu0 %v448
    %1454 = vmatpush1.msra.mxu0 %v447
    %1455 = vmatprep.subr.mxu0 %v452
    %1456 = vmatpush1.msra.mxu0 %v451
    %1457 = vmatprep.subr.mxu0 %v456
    %1458 = vmatpush1.msra.mxu0 %v455
    %1459 = vmatprep.subr.mxu0 %v460
    %1460 = vmatpush1.msra.mxu0 %v459
    %1461 = vmatprep.subr.mxu0 %v464
    %1462 = vmatpush1.msra.mxu0 %v463
    %1463 = vmatprep.subr.mxu0 %v468
    %1464 = vmatpush1.msra.mxu0 %v467
    %1465 = vmatprep.subr.mxu0 %v472
    %1466 = vmatpush1.msra.mxu0 %v471
    %1467 = vmatprep.subr.mxu0 %v476
    %1468 = vmatpush1.msra.mxu0 %v475
    %1469 = vmatprep.subr.mxu0 %v480
    %1470 = vmatpush1.msra.mxu0 %v479
    %1471 = vmatprep.subr.mxu0 %v484
    %1472 = vmatpush1.msra.mxu0 %v483
    %1473 = vmatprep.subr.mxu0 0.0
    %1474 = vmatpush1.msra.mxu0 0.0
    %1475 = vmatprep.subr.mxu0 0.0
    %1476 = vmatpush1.msra.mxu0 0.0
    %1477 = vmatprep.subr.mxu0 0.0
    %1478 = vmatpush1.msra.mxu0 0.0
    %1479 = vmatprep.subr.mxu0 0.0
    %1480 = vmatpush1.msra.mxu0 0.0
    %1481 = vmatprep.subr.mxu0 0.0
    %1482 = vmatpush1.msra.mxu0 0.0
    %1483 = vmatprep.subr.mxu0 0.0
    %1484 = vmatpush1.msra.mxu0 0.0
    %1485 = vmatprep.subr.mxu0 0.0
    %1486 = vmatpush1.msra.mxu0 0.0
    %1487 = vmatprep.subr.mxu0 0.0
    %1488 = vmatpush1.msra.mxu0 0.0
    %1489 = vmatprep.subr.mxu0 0.0
    %1490 = vmatpush1.msra.mxu0 0.0
    %1491 = vmatprep.subr.mxu0 0.0
    %1492 = vmatpush1.msra.mxu0 0.0
    %1493 = vmatprep.subr.mxu0 0.0
    %1494 = vmatpush1.msra.mxu0 0.0
    %1495 = vmatprep.subr.mxu0 0.0
    %1496 = vmatpush1.msra.mxu0 0.0
    %1497 = vmatprep.subr.mxu0 0.0
    %1498 = vmatpush1.msra.mxu0 0.0
    %1499 = vmatprep.subr.mxu0 0.0
    %1500 = vmatpush1.msra.mxu0 0.0
    %1501 = vmatprep.subr.mxu0 0.0
    %1502 = vmatpush1.msra.mxu0 0.0
    %1503 = vmatprep.subr.mxu0 0.0
    %1504 = vmatpush1.msra.mxu0 0.0
    %1505 = vmatprep.mubr.f32.mxu0 0.0
    %1506 = vmatmul.mubr.f32.gmra.mrb[0].mxu0 %v1362
    %v1507 = vpop.f32.mrb[0].mxu0
    %v1508 = vadd.f32 0.0, %v1507
    %v1509 = vpop.f32.mrb[0].mxu0
    %v1510 = vadd.f32 0.0, %v1509
    %1511 = vdwg.mxu0
    %v1512 = vadd.f32 %v1366, %v1437
    %v1513 = vadd.f32 %v1367, %v1439
    %v1514 = vadd.f32 %v1368, %v1508
    %v1515 = vadd.f32 %v1369, %v1510
    %v1516 = vxor.u32 %v1512, 2147483648
    %v1517 = vxor.u32 %v1513, 2147483648
    %v1518 = vxor.u32 %v1514, 2147483648
    %v1519 = vmul.f32 %v1516, 1.442695
    %v1520 = vpow.pop %v1519
    %v1521 = vmul.f32 %v1517, 1.442695
    %v1522 = vpow.pop %v1521
    %v1523 = vmul.f32 %v1518, 1.442695
    %v1524 = vpow.pop %v1523
    %v1525 = vadd.f32 %v1520, 1.0
    %v1526 = vadd.f32 %v1522, 1.0
    %v1527 = vadd.f32 %v1524, 1.0
    %v1528 = vrcp.pop %v1525
    %v1529 = vmul.f32 1.0, %v1528
    %v1530 = vrcp.pop %v1526
    %v1531 = vmul.f32 1.0, %v1530
    %v1532 = vrcp.pop %v1527
    %v1533 = vmul.f32 1.0, %v1532
    %v1534 = vtanh.pop %v1515
    %v1535 = vmul.f32 %v1531, %v1360
    %v1536 = vmul.f32 %v1529, %v1534
    %v1537 = vadd.f32 %v1535, %v1536
    %v1538 = vtanh.pop %v1537
    %v1539 = vmul.f32 %v1533, %v1538
    %s1540 = smul.u32 6, 4
    %s1541 = smul.addr %s1540, 8
    %s1542 = scalar_lea.vmem [#allocation2], %s1541
    %v1543 = vld [vmem:[%s1542] sm:$0xff]
    %v1544 = vld [vmem:[%s1542 + $0x8] sm:$0xff]
    %v1545 = vld [vmem:[%s1542 + $0x10] sm:$0xff]
    %v1546 = vld [vmem:[%s1542 + $0x18] sm:$0xff]
    %1547 = vmatprep.subr.mxu0 %v422
    %1548 = vmatpush1.msra.mxu0 %v421
    %1549 = vmatprep.subr.mxu0 %v426
    %1550 = vmatpush1.msra.mxu0 %v425
    %1551 = vmatprep.subr.mxu0 %v430
    %1552 = vmatpush1.msra.mxu0 %v429
    %1553 = vmatprep.subr.mxu0 %v434
    %1554 = vmatpush1.msra.mxu0 %v433
    %1555 = vmatprep.subr.mxu0 %v438
    %1556 = vmatpush1.msra.mxu0 %v437
    %1557 = vmatprep.subr.mxu0 %v442
    %1558 = vmatpush1.msra.mxu0 %v441
    %1559 = vmatprep.subr.mxu0 %v446
    %1560 = vmatpush1.msra.mxu0 %v445
    %1561 = vmatprep.subr.mxu0 %v450
    %1562 = vmatpush1.msra.mxu0 %v449
    %1563 = vmatprep.subr.mxu0 %v454
    %1564 = vmatpush1.msra.mxu0 %v453
    %1565 = vmatprep.subr.mxu0 %v458
    %1566 = vmatpush1.msra.mxu0 %v457
    %1567 = vmatprep.subr.mxu0 %v462
    %1568 = vmatpush1.msra.mxu0 %v461
    %1569 = vmatprep.subr.mxu0 %v466
    %1570 = vmatpush1.msra.mxu0 %v465
    %1571 = vmatprep.subr.mxu0 %v470
    %1572 = vmatpush1.msra.mxu0 %v469
    %1573 = vmatprep.subr.mxu0 %v474
    %1574 = vmatpush1.msra.mxu0 %v473
    %1575 = vmatprep.subr.mxu0 %v478
    %1576 = vmatpush1.msra.mxu0 %v477
    %1577 = vmatprep.subr.mxu0 %v482
    %1578 = vmatpush1.msra.mxu0 %v481
    %1579 = vmatprep.subr.mxu0 0.0
    %1580 = vmatpush1.msra.mxu0 0.0
    %1581 = vmatprep.subr.mxu0 0.0
    %1582 = vmatpush1.msra.mxu0 0.0
    %1583 = vmatprep.subr.mxu0 0.0
    %1584 = vmatpush1.msra.mxu0 0.0
    %1585 = vmatprep.subr.mxu0 0.0
    %1586 = vmatpush1.msra.mxu0 0.0
    %1587 = vmatprep.subr.mxu0 0.0
    %1588 = vmatpush1.msra.mxu0 0.0
    %1589 = vmatprep.subr.mxu0 0.0
    %1590 = vmatpush1.msra.mxu0 0.0
    %1591 = vmatprep.subr.mxu0 0.0
    %1592 = vmatpush1.msra.mxu0 0.0
    %1593 = vmatprep.subr.mxu0 0.0
    %1594 = vmatpush1.msra.mxu0 0.0
    %1595 = vmatprep.subr.mxu0 0.0
    %1596 = vmatpush1.msra.mxu0 0.0
    %1597 = vmatprep.subr.mxu0 0.0
    %1598 = vmatpush1.msra.mxu0 0.0
    %1599 = vmatprep.subr.mxu0 0.0
    %1600 = vmatpush1.msra.mxu0 0.0
    %1601 = vmatprep.subr.mxu0 0.0
    %1602 = vmatpush1.msra.mxu0 0.0
    %1603 = vmatprep.subr.mxu0 0.0
    %1604 = vmatpush1.msra.mxu0 0.0
    %1605 = vmatprep.subr.mxu0 0.0
    %1606 = vmatpush1.msra.mxu0 0.0
    %1607 = vmatprep.subr.mxu0 0.0
    %1608 = vmatpush1.msra.mxu0 0.0
    %1609 = vmatprep.subr.mxu0 0.0
    %1610 = vmatpush1.msra.mxu0 0.0
    %1611 = vmatprep.mubr.f32.mxu0 0.0
    %1612 = vmatmul.mubr.f32.gmra.mrb[0].mxu0 %v1539
    %v1613 = vpop.f32.mrb[0].mxu0
    %v1614 = vadd.f32 0.0, %v1613
    %v1615 = vpop.f32.mrb[0].mxu0
    %v1616 = vadd.f32 0.0, %v1615
    %1617 = vdwg.mxu0
    %1618 = vmatprep.subr.mxu0 %v424
    %1619 = vmatpush1.msra.mxu0 %v423
    %1620 = vmatprep.subr.mxu0 %v428
    %1621 = vmatpush1.msra.mxu0 %v427
    %1622 = vmatprep.subr.mxu0 %v432
    %1623 = vmatpush1.msra.mxu0 %v431
    %1624 = vmatprep.subr.mxu0 %v436
    %1625 = vmatpush1.msra.mxu0 %v435
    %1626 = vmatprep.subr.mxu0 %v440
    %1627 = vmatpush1.msra.mxu0 %v439
    %1628 = vmatprep.subr.mxu0 %v444
    %1629 = vmatpush1.msra.mxu0 %v443
    %1630 = vmatprep.subr.mxu0 %v448
    %1631 = vmatpush1.msra.mxu0 %v447
    %1632 = vmatprep.subr.mxu0 %v452
    %1633 = vmatpush1.msra.mxu0 %v451
    %1634 = vmatprep.subr.mxu0 %v456
    %1635 = vmatpush1.msra.mxu0 %v455
    %1636 = vmatprep.subr.mxu0 %v460
    %1637 = vmatpush1.msra.mxu0 %v459
    %1638 = vmatprep.subr.mxu0 %v464
    %1639 = vmatpush1.msra.mxu0 %v463
    %1640 = vmatprep.subr.mxu0 %v468
    %1641 = vmatpush1.msra.mxu0 %v467
    %1642 = vmatprep.subr.mxu0 %v472
    %1643 = vmatpush1.msra.mxu0 %v471
    %1644 = vmatprep.subr.mxu0 %v476
    %1645 = vmatpush1.msra.mxu0 %v475
    %1646 = vmatprep.subr.mxu0 %v480
    %1647 = vmatpush1.msra.mxu0 %v479
    %1648 = vmatprep.subr.mxu0 %v484
    %1649 = vmatpush1.msra.mxu0 %v483
    %1650 = vmatprep.subr.mxu0 0.0
    %1651 = vmatpush1.msra.mxu0 0.0
    %1652 = vmatprep.subr.mxu0 0.0
    %1653 = vmatpush1.msra.mxu0 0.0
    %1654 = vmatprep.subr.mxu0 0.0
    %1655 = vmatpush1.msra.mxu0 0.0
    %1656 = vmatprep.subr.mxu0 0.0
    %1657 = vmatpush1.msra.mxu0 0.0
    %1658 = vmatprep.subr.mxu0 0.0
    %1659 = vmatpush1.msra.mxu0 0.0
    %1660 = vmatprep.subr.mxu0 0.0
    %1661 = vmatpush1.msra.mxu0 0.0
    %1662 = vmatprep.subr.mxu0 0.0
    %1663 = vmatpush1.msra.mxu0 0.0
    %1664 = vmatprep.subr.mxu0 0.0
    %1665 = vmatpush1.msra.mxu0 0.0
    %1666 = vmatprep.subr.mxu0 0.0
    %1667 = vmatpush1.msra.mxu0 0.0
    %1668 = vmatprep.subr.mxu0 0.0
    %1669 = vmatpush1.msra.mxu0 0.0
    %1670 = vmatprep.subr.mxu0 0.0
    %1671 = vmatpush1.msra.mxu0 0.0
    %1672 = vmatprep.subr.mxu0 0.0
    %1673 = vmatpush1.msra.mxu0 0.0
    %1674 = vmatprep.subr.mxu0 0.0
    %1675 = vmatpush1.msra.mxu0 0.0
    %1676 = vmatprep.subr.mxu0 0.0
    %1677 = vmatpush1.msra.mxu0 0.0
    %1678 = vmatprep.subr.mxu0 0.0
    %1679 = vmatpush1.msra.mxu0 0.0
    %1680 = vmatprep.subr.mxu0 0.0
    %1681 = vmatpush1.msra.mxu0 0.0
    %1682 = vmatprep.mubr.f32.mxu0 0.0
    %1683 = vmatmul.mubr.f32.gmra.mrb[0].mxu0 %v1539
    %v1684 = vpop.f32.mrb[0].mxu0
    %v1685 = vadd.f32 0.0, %v1684
    %v1686 = vpop.f32.mrb[0].mxu0
    %v1687 = vadd.f32 0.0, %v1686
    %1688 = vdwg.mxu0
    %v1689 = vadd.f32 %v1543, %v1614
    %v1690 = vadd.f32 %v1544, %v1616
    %v1691 = vadd.f32 %v1545, %v1685
    %v1692 = vadd.f32 %v1546, %v1687
    %v1693 = vxor.u32 %v1689, 2147483648
    %v1694 = vxor.u32 %v1690, 2147483648
    %v1695 = vxor.u32 %v1691, 2147483648
    %v1696 = vmul.f32 %v1693, 1.442695
    %v1697 = vpow.pop %v1696
    %v1698 = vmul.f32 %v1694, 1.442695
    %v1699 = vpow.pop %v1698
    %v1700 = vmul.f32 %v1695, 1.442695
    %v1701 = vpow.pop %v1700
    %v1702 = vadd.f32 %v1697, 1.0
    %v1703 = vadd.f32 %v1699, 1.0
    %v1704 = vadd.f32 %v1701, 1.0
    %v1705 = vrcp.pop %v1702
    %v1706 = vmul.f32 1.0, %v1705
    %v1707 = vrcp.pop %v1703
    %v1708 = vmul.f32 1.0, %v1707
    %v1709 = vrcp.pop %v1704
    %v1710 = vmul.f32 1.0, %v1709
    %v1711 = vtanh.pop %v1692
    %v1712 = vmul.f32 %v1708, %v1537
    %v1713 = vmul.f32 %v1706, %v1711
    %v1714 = vadd.f32 %v1712, %v1713
    %v1715 = vtanh.pop %v1714
    %v1716 = vmul.f32 %v1710, %v1715
    %s1717 = smul.u32 7, 4
    %s1718 = smul.addr %s1717, 8
    %s1719 = scalar_lea.vmem [#allocation2], %s1718
    %v1720 = vld [vmem:[%s1719] sm:$0xff]
    %v1721 = vld [vmem:[%s1719 + $0x8] sm:$0xff]
    %v1722 = vld [vmem:[%s1719 + $0x10] sm:$0xff]
    %v1723 = vld [vmem:[%s1719 + $0x18] sm:$0xff]
    %1724 = vmatprep.subr.mxu0 %v422
    %1725 = vmatpush1.msra.mxu0 %v421
    %1726 = vmatprep.subr.mxu0 %v426
    %1727 = vmatpush1.msra.mxu0 %v425
    %1728 = vmatprep.subr.mxu0 %v430
    %1729 = vmatpush1.msra.mxu0 %v429
    %1730 = vmatprep.subr.mxu0 %v434
    %1731 = vmatpush1.msra.mxu0 %v433
    %1732 = vmatprep.subr.mxu0 %v438
    %1733 = vmatpush1.msra.mxu0 %v437
    %1734 = vmatprep.subr.mxu0 %v442
    %1735 = vmatpush1.msra.mxu0 %v441
    %1736 = vmatprep.subr.mxu0 %v446
    %1737 = vmatpush1.msra.mxu0 %v445
    %1738 = vmatprep.subr.mxu0 %v450
    %1739 = vmatpush1.msra.mxu0 %v449
    %1740 = vmatprep.subr.mxu0 %v454
    %1741 = vmatpush1.msra.mxu0 %v453
    %1742 = vmatprep.subr.mxu0 %v458
    %1743 = vmatpush1.msra.mxu0 %v457
    %1744 = vmatprep.subr.mxu0 %v462
    %1745 = vmatpush1.msra.mxu0 %v461
    %1746 = vmatprep.subr.mxu0 %v466
    %1747 = vmatpush1.msra.mxu0 %v465
    %1748 = vmatprep.subr.mxu0 %v470
    %1749 = vmatpush1.msra.mxu0 %v469
    %1750 = vmatprep.subr.mxu0 %v474
    %1751 = vmatpush1.msra.mxu0 %v473
    %1752 = vmatprep.subr.mxu0 %v478
    %1753 = vmatpush1.msra.mxu0 %v477
    %1754 = vmatprep.subr.mxu0 %v482
    %1755 = vmatpush1.msra.mxu0 %v481
    %1756 = vmatprep.subr.mxu0 0.0
    %1757 = vmatpush1.msra.mxu0 0.0
    %1758 = vmatprep.subr.mxu0 0.0
    %1759 = vmatpush1.msra.mxu0 0.0
    %1760 = vmatprep.subr.mxu0 0.0
    %1761 = vmatpush1.msra.mxu0 0.0
    %1762 = vmatprep.subr.mxu0 0.0
    %1763 = vmatpush1.msra.mxu0 0.0
    %1764 = vmatprep.subr.mxu0 0.0
    %1765 = vmatpush1.msra.mxu0 0.0
    %1766 = vmatprep.subr.mxu0 0.0
    %1767 = vmatpush1.msra.mxu0 0.0
    %1768 = vmatprep.subr.mxu0 0.0
    %1769 = vmatpush1.msra.mxu0 0.0
    %1770 = vmatprep.subr.mxu0 0.0
    %1771 = vmatpush1.msra.mxu0 0.0
    %1772 = vmatprep.subr.mxu0 0.0
    %1773 = vmatpush1.msra.mxu0 0.0
    %1774 = vmatprep.subr.mxu0 0.0
    %1775 = vmatpush1.msra.mxu0 0.0
    %1776 = vmatprep.subr.mxu0 0.0
    %1777 = vmatpush1.msra.mxu0 0.0
    %1778 = vmatprep.subr.mxu0 0.0
    %1779 = vmatpush1.msra.mxu0 0.0
    %1780 = vmatprep.subr.mxu0 0.0
    %1781 = vmatpush1.msra.mxu0 0.0
    %1782 = vmatprep.subr.mxu0 0.0
    %1783 = vmatpush1.msra.mxu0 0.0
    %1784 = vmatprep.subr.mxu0 0.0
    %1785 = vmatpush1.msra.mxu0 0.0
    %1786 = vmatprep.subr.mxu0 0.0
    %1787 = vmatpush1.msra.mxu0 0.0
    %1788 = vmatprep.mubr.f32.mxu0 0.0
    %1789 = vmatmul.mubr.f32.gmra.mrb[0].mxu0 %v1716
    %v1790 = vpop.f32.mrb[0].mxu0
    %v1791 = vadd.f32 0.0, %v1790
    %v1792 = vpop.f32.mrb[0].mxu0
    %v1793 = vadd.f32 0.0, %v1792
    %1794 = vdwg.mxu0
    %1795 = vmatprep.subr.mxu0 %v424
    %1796 = vmatpush1.msra.mxu0 %v423
    %1797 = vmatprep.subr.mxu0 %v428
    %1798 = vmatpush1.msra.mxu0 %v427
    %1799 = vmatprep.subr.mxu0 %v432
    %1800 = vmatpush1.msra.mxu0 %v431
    %1801 = vmatprep.subr.mxu0 %v436
    %1802 = vmatpush1.msra.mxu0 %v435
    %1803 = vmatprep.subr.mxu0 %v440
    %1804 = vmatpush1.msra.mxu0 %v439
    %1805 = vmatprep.subr.mxu0 %v444
    %1806 = vmatpush1.msra.mxu0 %v443
    %1807 = vmatprep.subr.mxu0 %v448
    %1808 = vmatpush1.msra.mxu0 %v447
    %1809 = vmatprep.subr.mxu0 %v452
    %1810 = vmatpush1.msra.mxu0 %v451
    %1811 = vmatprep.subr.mxu0 %v456
    %1812 = vmatpush1.msra.mxu0 %v455
    %1813 = vmatprep.subr.mxu0 %v460
    %1814 = vmatpush1.msra.mxu0 %v459
    %1815 = vmatprep.subr.mxu0 %v464
    %1816 = vmatpush1.msra.mxu0 %v463
    %1817 = vmatprep.subr.mxu0 %v468
    %1818 = vmatpush1.msra.mxu0 %v467
    %1819 = vmatprep.subr.mxu0 %v472
    %1820 = vmatpush1.msra.mxu0 %v471
    %1821 = vmatprep.subr.mxu0 %v476
    %1822 = vmatpush1.msra.mxu0 %v475
    %1823 = vmatprep.subr.mxu0 %v480
    %1824 = vmatpush1.msra.mxu0 %v479
    %1825 = vmatprep.subr.mxu0 %v484
    %1826 = vmatpush1.msra.mxu0 %v483
    %1827 = vmatprep.subr.mxu0 0.0
    %1828 = vmatpush1.msra.mxu0 0.0
    %1829 = vmatprep.subr.mxu0 0.0
    %1830 = vmatpush1.msra.mxu0 0.0
    %1831 = vmatprep.subr.mxu0 0.0
    %1832 = vmatpush1.msra.mxu0 0.0
    %1833 = vmatprep.subr.mxu0 0.0
    %1834 = vmatpush1.msra.mxu0 0.0
    %1835 = vmatprep.subr.mxu0 0.0
    %1836 = vmatpush1.msra.mxu0 0.0
    %1837 = vmatprep.subr.mxu0 0.0
    %1838 = vmatpush1.msra.mxu0 0.0
    %1839 = vmatprep.subr.mxu0 0.0
    %1840 = vmatpush1.msra.mxu0 0.0
    %1841 = vmatprep.subr.mxu0 0.0
    %1842 = vmatpush1.msra.mxu0 0.0
    %1843 = vmatprep.subr.mxu0 0.0
    %1844 = vmatpush1.msra.mxu0 0.0
    %1845 = vmatprep.subr.mxu0 0.0
    %1846 = vmatpush1.msra.mxu0 0.0
    %1847 = vmatprep.subr.mxu0 0.0
    %1848 = vmatpush1.msra.mxu0 0.0
    %1849 = vmatprep.subr.mxu0 0.0
    %1850 = vmatpush1.msra.mxu0 0.0
    %1851 = vmatprep.subr.mxu0 0.0
    %1852 = vmatpush1.msra.mxu0 0.0
    %1853 = vmatprep.subr.mxu0 0.0
    %1854 = vmatpush1.msra.mxu0 0.0
    %1855 = vmatprep.subr.mxu0 0.0
    %1856 = vmatpush1.msra.mxu0 0.0
    %1857 = vmatprep.subr.mxu0 0.0
    %1858 = vmatpush1.msra.mxu0 0.0
    %1859 = vmatprep.mubr.f32.mxu0 0.0
    %1860 = vmatmul.mubr.f32.gmra.mrb[0].mxu0 %v1716
    %v1861 = vpop.f32.mrb[0].mxu0
    %v1862 = vadd.f32 0.0, %v1861
    %v1863 = vpop.f32.mrb[0].mxu0
    %v1864 = vadd.f32 0.0, %v1863
    %1865 = vdwg.mxu0
    %v1866 = vadd.f32 %v1720, %v1791
    %v1867 = vadd.f32 %v1721, %v1793
    %v1868 = vadd.f32 %v1722, %v1862
    %v1869 = vadd.f32 %v1723, %v1864
    %v1870 = vxor.u32 %v1866, 2147483648
    %v1871 = vxor.u32 %v1867, 2147483648
    %v1872 = vxor.u32 %v1868, 2147483648
    %v1873 = vmul.f32 %v1870, 1.442695
    %v1874 = vpow.pop %v1873
    %v1875 = vmul.f32 %v1871, 1.442695
    %v1876 = vpow.pop %v1875
    %v1877 = vmul.f32 %v1872, 1.442695
    %v1878 = vpow.pop %v1877
    %v1879 = vadd.f32 %v1874, 1.0
    %v1880 = vadd.f32 %v1876, 1.0
    %v1881 = vadd.f32 %v1878, 1.0
    %v1882 = vrcp.pop %v1879
    %v1883 = vmul.f32 1.0, %v1882
    %v1884 = vrcp.pop %v1880
    %v1885 = vmul.f32 1.0, %v1884
    %v1886 = vrcp.pop %v1881
    %v1887 = vmul.f32 1.0, %v1886
    %v1888 = vtanh.pop %v1869
    %v1889 = vmul.f32 %v1885, %v1714
    %v1890 = vmul.f32 %v1883, %v1888
    %v1891 = vadd.f32 %v1889, %v1890
    %v1892 = vtanh.pop %v1891
    %v1893 = vmul.f32 %v1887, %v1892
    %v1894 = vld [vmem:[%s4] sm:$0xff]
    %v1895 = vld [vmem:[%s4 + $0x8] sm:$0xff]
    %v1896 = vld [vmem:[%s4 + $0x10] sm:$0xff]
    %v1897 = vld [vmem:[%s4 + $0x18] sm:$0xff]
    %v1898 = vld [vmem:[%s4 + $0x20] sm:$0xff]
    %v1899 = vld [vmem:[%s4 + $0x28] sm:$0xff]
    %v1900 = vld [vmem:[%s4 + $0x30] sm:$0xff]
    %v1901 = vld [vmem:[%s4 + $0x38] sm:$0xff]
    %v1902 = vld [vmem:[%s4 + $0x40] sm:$0xff]
    %v1903 = vld [vmem:[%s4 + $0x48] sm:$0xff]
    %v1904 = vld [vmem:[%s4 + $0x50] sm:$0xff]
    %v1905 = vld [vmem:[%s4 + $0x58] sm:$0xff]
    %v1906 = vld [vmem:[%s4 + $0x60] sm:$0xff]
    %v1907 = vld [vmem:[%s4 + $0x68] sm:$0xff]
    %v1908 = vld [vmem:[%s4 + $0x70] sm:$0xff]
    %v1909 = vld [vmem:[%s4 + $0x78] sm:$0xff]
    %v1910 = vld [vmem:[%s5] sm:$0x1]
    %v1912 = vlaneseq
    %v1913 = vshrl.u32 %v1912, 7
    %v1914 = vsub.s32 0, %v1913
    %v1915 = vrot.slane %v1910, %v1914
    %1917 = vmatprep.subr.mxu0 0.0
    %1918 = vmatpush1.msra.mxu0 %v1894
    %1919 = vmatprep.subr.mxu0 0.0
    %1920 = vmatpush1.msra.mxu0 %v1895
    %1921 = vmatprep.subr.mxu0 0.0
    %1922 = vmatpush1.msra.mxu0 %v1896
    %1923 = vmatprep.subr.mxu0 0.0
    %1924 = vmatpush1.msra.mxu0 %v1897
    %1925 = vmatprep.subr.mxu0 0.0
    %1926 = vmatpush1.msra.mxu0 %v1898
    %1927 = vmatprep.subr.mxu0 0.0
    %1928 = vmatpush1.msra.mxu0 %v1899
    %1929 = vmatprep.subr.mxu0 0.0
    %1930 = vmatpush1.msra.mxu0 %v1900
    %1931 = vmatprep.subr.mxu0 0.0
    %1932 = vmatpush1.msra.mxu0 %v1901
    %1933 = vmatprep.subr.mxu0 0.0
    %1934 = vmatpush1.msra.mxu0 %v1902
    %1935 = vmatprep.subr.mxu0 0.0
    %1936 = vmatpush1.msra.mxu0 %v1903
    %1937 = vmatprep.subr.mxu0 0.0
    %1938 = vmatpush1.msra.mxu0 %v1904
    %1939 = vmatprep.subr.mxu0 0.0
    %1940 = vmatpush1.msra.mxu0 %v1905
    %1941 = vmatprep.subr.mxu0 0.0
    %1942 = vmatpush1.msra.mxu0 %v1906
    %1943 = vmatprep.subr.mxu0 0.0
    %1944 = vmatpush1.msra.mxu0 %v1907
    %1945 = vmatprep.subr.mxu0 0.0
    %1946 = vmatpush1.msra.mxu0 %v1908
    %1947 = vmatprep.subr.mxu0 0.0
    %1948 = vmatpush1.msra.mxu0 %v1909
    %1949 = vmatprep.subr.mxu0 0.0
    %1950 = vmatpush1.msra.mxu0 0.0
    %1951 = vmatprep.subr.mxu0 0.0
    %1952 = vmatpush1.msra.mxu0 0.0
    %1953 = vmatprep.subr.mxu0 0.0
    %1954 = vmatpush1.msra.mxu0 0.0
    %1955 = vmatprep.subr.mxu0 0.0
    %1956 = vmatpush1.msra.mxu0 0.0
    %1957 = vmatprep.subr.mxu0 0.0
    %1958 = vmatpush1.msra.mxu0 0.0
    %1959 = vmatprep.subr.mxu0 0.0
    %1960 = vmatpush1.msra.mxu0 0.0
    %1961 = vmatprep.subr.mxu0 0.0
    %1962 = vmatpush1.msra.mxu0 0.0
    %1963 = vmatprep.subr.mxu0 0.0
    %1964 = vmatpush1.msra.mxu0 0.0
    %1965 = vmatprep.subr.mxu0 0.0
    %1966 = vmatpush1.msra.mxu0 0.0
    %1967 = vmatprep.subr.mxu0 0.0
    %1968 = vmatpush1.msra.mxu0 0.0
    %1969 = vmatprep.subr.mxu0 0.0
    %1970 = vmatpush1.msra.mxu0 0.0
    %1971 = vmatprep.subr.mxu0 0.0
    %1972 = vmatpush1.msra.mxu0 0.0
    %1973 = vmatprep.subr.mxu0 0.0
    %1974 = vmatpush1.msra.mxu0 0.0
    %1975 = vmatprep.subr.mxu0 0.0
    %1976 = vmatpush1.msra.mxu0 0.0
    %1977 = vmatprep.subr.mxu0 0.0
    %1978 = vmatpush1.msra.mxu0 0.0
    %1979 = vmatprep.subr.mxu0 0.0
    %1980 = vmatpush1.msra.mxu0 0.0
    %1981 = vmatprep.mubr.f32.mxu0 0.0
    %1982 = vmatmul.mubr.f32.gmra.mrb[0].mxu0 %v1893
    %v1983 = vpop.f32.mrb[0].mxu0
    %v1984 = vadd.f32 %v1915, %v1983
    %v1985 = vpop.f32.mrb[0].mxu0
    %1986 = vdwg.mxu0
    %1987 = vst [vmem:[%s6] sm:$0xff] %v1984
    // Predicated region
    $region38: #{lstm_model_forward.1} parent=1 // pred_check
      _
    $region39: #{lstm_model_forward.1} parent=1 // pred_check_branch
      %1989 = sbr.rel (0) target = $region41
    $region40: #{lstm_model_forward.1} parent=1 // pred_region
      _
    $region41: #{lstm_model_forward.1} parent=1 // pred_fallthru
      _
    // Predicated region
    $region42: #{lstm_model_forward.1} parent=1 // pred_check
      _
    $region43: #{lstm_model_forward.1} parent=1 // pred_check_branch
      %1991 = sbr.rel (0) target = $region45
    $region44: #{lstm_model_forward.1} parent=1 // pred_region
      _
    $region45: #{lstm_model_forward.1} parent=1 // pred_fallthru
      _
    %1992 = vsyncpa [#allocation4], 1
    %1993 = vsyncpa [#allocation6], 1

</llo_original>
